<compile_context>
chip_gen: v5e
topology: v5e:2x2
jax: 0.10.0
libtpu: 0.0.40
codegen_flags: <defaults>
</compile_context>

<pallas_src>
import jax
import jax.numpy as jnp
from jax.experimental import pallas as pl
from jax.experimental.pallas import tpu as pltpu

# ------------------------- problem sizes -------------------------
D = 128           # input feature dim (flattened waveform)
H = 128           # encoder final hidden dim (encoder[-1].output_dim)
SUP = 4           # supervised latent dim
UNSUP = 12        # unsupervised latent dim
LATENT = SUP + UNSUP
LANE = 128        # TPU lane width
BM = 256          # batch rows per grid step (multiple of 16 for bf16 packing)

NUM_W_BLOCKS = 6  # We, Wmu|Wlv, Wlv_aligned, Wy_shifted_diag, Wd_pad, Wo


def psvae_kernel(xe_ref, w_ref, b_ref, out_ref):
    f32 = jnp.float32
    bf16 = jnp.bfloat16

    # ---- packed activations (bf16): lanes 0:D = x, lanes D:D+LATENT = eps ----
    x = xe_ref[:, :D]                         # (BM, 128) bf16
    eps = xe_ref[:, D:].astype(f32)           # (BM, 128) f32, zero beyond LATENT

    # ---- biases / diag params (f32), one row each of the (8,128) slab ----
    be = b_ref[0:1, :]                        # encoder bias
    bmulv = b_ref[1:2, :]                     # bmu@0:16 | blv@16:32 | 0
    blv0 = b_ref[2:3, :]                      # blv@0:16 | 0 (aligned copy)
    by = b_ref[3:4, :]                        # DiagLinear bias @ 32:36 | 0
    bd = b_ref[4:5, :]                        # fc_decoder bias
    bo = b_ref[5:6, :]                        # decoder bias

    # ---- bf16 weight slab, static 128-row slices ----
    we = w_ref[0 * LANE:1 * LANE, :]          # (D, H)      encoder Linear
    wmlv = w_ref[1 * LANE:2 * LANE, :]        # (H, 128)    [W_mu | W_logvar | 0]
    wlv0 = w_ref[2 * LANE:3 * LANE, :]        # (H, 128)    [W_logvar | 0]  (mu-lane aligned)
    wy = w_ref[3 * LANE:4 * LANE, :]          # (128, 128)  shifted-diag DiagLinear
    wd = w_ref[4 * LANE:5 * LANE, :]          # (128, H)    fc_decoder, rows>=LATENT zero
    wo = w_ref[5 * LANE:6 * LANE, :]          # (H, D)      decoder Linear

    dot = lambda a, b: jnp.dot(a, b, preferred_element_type=f32)

    # ---- encode: h = relu(x @ We + be) ----
    h = jnp.maximum(dot(x, we) + be, 0.0)
    hbf = h.astype(bf16)

    # ---- fc_mu | fc_logvar ----
    mulv = dot(hbf, wmlv) + bmulv             # mu@0:16, logvar@16:32, 0 elsewhere
    lv_al = dot(hbf, wlv0) + blv0             # logvar@0:16, exactly 0 elsewhere

    # ---- reparametrize (no lane moves, no NaN hazard: exp(0)=1 on dead lanes,
    #      eps is zero there) ----
    z = mulv + eps * jnp.exp(0.5 * lv_al)     # z@0:16, logvar@16:32, 0 elsewhere
    zbf = z.astype(bf16)

    # ---- DiagLinear head, placed directly on output lanes 32:36 by the
    #      shifted-diagonal matrix (zero rows kill the logvar lanes of z) ----
    yshift = dot(zbf, wy) + by                # y_hat@32:36, 0 elsewhere

    # ---- decode: recon = decoder(fc_decoder(z)) ----
    dec_in = dot(zbf, wd) + bd
    recon = dot(dec_in.astype(bf16), wo) + bo

    # ---- lane-dense 2x128 output: recon | (mu|logvar|y_hat) ----
    out_ref[:, :LANE] = recon
    out_ref[:, LANE:] = mulv + yshift


# --------------------------- host-side packing ---------------------------

def pack_inputs(x, eps, batch_pad):
    b = x.shape[0]
    xe = jnp.zeros((batch_pad, 2 * LANE), jnp.bfloat16)
    xe = xe.at[:b, :D].set(x.astype(jnp.bfloat16))
    xe = xe.at[:b, D:D + LATENT].set(eps.astype(jnp.bfloat16))
    return xe


def pack_params(params):
    we, be, wmu, bmu, wlv, blv, dw, db, wd, bd, wo, bo = params
    f32 = jnp.float32

    wmulv = jnp.zeros((H, LANE), f32)
    wmulv = wmulv.at[:, :LATENT].set(wmu).at[:, LATENT:2 * LATENT].set(wlv)
    wlv0 = jnp.zeros((H, LANE), f32).at[:, :LATENT].set(wlv)
    # Shifted diagonal: y_hat[i] = z[i] * dw[i] lands at lane 2*LATENT + i.
    wy = jnp.zeros((LANE, LANE), f32)
    wy = wy.at[jnp.arange(SUP), 2 * LATENT + jnp.arange(SUP)].set(dw.reshape(-1))
    wd_pad = jnp.zeros((LANE, H), f32).at[:LATENT, :].set(wd)

    w_slab = jnp.concatenate([we, wmulv, wlv0, wy, wd_pad, wo],
                             axis=0).astype(jnp.bfloat16)

    b_slab = jnp.zeros((8, LANE), f32)
    b_slab = b_slab.at[0, :H].set(be.reshape(-1))
    b_slab = b_slab.at[1, :LATENT].set(bmu.reshape(-1))
    b_slab = b_slab.at[1, LATENT:2 * LATENT].set(blv.reshape(-1))
    b_slab = b_slab.at[2, :LATENT].set(blv.reshape(-1))
    b_slab = b_slab.at[3, 2 * LATENT:2 * LATENT + SUP].set(db.reshape(-1))
    b_slab = b_slab.at[4, :H].set(bd.reshape(-1))
    b_slab = b_slab.at[5, :D].set(bo.reshape(-1))
    return w_slab, b_slab


def psvae_forward(x, eps, w_slab, b_slab, *, bm=BM):
    batch = x.shape[0]
    bpad = ((batch + bm - 1) // bm) * bm       # pad batch up to a BM multiple
    xe = pack_inputs(x, eps, bpad)

    out = pl.pallas_call(
        psvae_kernel,
        out_shape=jax.ShapeDtypeStruct((bpad, 2 * LANE), jnp.float32),
        grid=(bpad // bm,),
        in_specs=[
            pl.BlockSpec((bm, 2 * LANE), lambda i: (i, 0)),            # activations
            pl.BlockSpec((NUM_W_BLOCKS * LANE, LANE), lambda i: (0, 0)),  # weights (resident)
            pl.BlockSpec((8, LANE), lambda i: (0, 0)),                 # biases  (resident)
        ],
        out_specs=pl.BlockSpec((bm, 2 * LANE), lambda i: (i, 0)),
        compiler_params=pltpu.CompilerParams(
            dimension_semantics=("parallel",)),
    )(xe, w_slab, b_slab)

    recon = out[:batch, :D]
    mu = out[:batch, LANE:LANE + LATENT]
    logvar = out[:batch, LANE + LATENT:LANE + 2 * LATENT]
    y_hat = out[:batch, LANE + 2 * LATENT:LANE + 2 * LATENT + SUP]
    return recon, y_hat, mu, logvar


# ----------------------------- reference ---------------------------------

def make_params(key):
    ks = jax.random.split(key, 12)
    scale = 0.05
    we = scale * jax.random.normal(ks[0], (D, H), jnp.float32)
    be = jnp.zeros((1, H), jnp.float32)
    wmu = scale * jax.random.normal(ks[1], (H, LATENT), jnp.float32)
    bmu = 0.01 * jax.random.normal(ks[2], (1, LATENT), jnp.float32)
    wlv = scale * jax.random.normal(ks[3], (H, LATENT), jnp.float32)
    blv = 0.01 * jax.random.normal(ks[4], (1, LATENT), jnp.float32)
    dw = jax.random.normal(ks[5], (1, SUP), jnp.float32)          # DiagLinear weight
    db = 0.01 * jax.random.normal(ks[6], (1, SUP), jnp.float32)   # DiagLinear bias
    wd = scale * jax.random.normal(ks[7], (LATENT, H), jnp.float32)
    bd = jnp.zeros((1, H), jnp.float32)
    wo = scale * jax.random.normal(ks[8], (H, D), jnp.float32)
    bo = jnp.zeros((1, D), jnp.float32)
    return (we, be, wmu, bmu, wlv, blv, dw, db, wd, bd, wo, bo)


def psvae_reference(x, eps, params):
    # Same bf16-operand / f32-accumulate numerics as the kernel.
    we, be, wmu, bmu, wlv, blv, dw, db, wd, bd, wo, bo = params
    f32 = jnp.float32
    bf = lambda a: a.astype(jnp.bfloat16)
    dot = lambda a, b: jnp.dot(bf(a), bf(b), preferred_element_type=f32)
    eps_q = bf(eps).astype(f32)
    h = jnp.maximum(dot(x, we) + be, 0.0)
    mu = dot(h, wmu) + bmu
    logvar = dot(h, wlv) + blv
    z = mu + eps_q * jnp.exp(0.5 * logvar)
    y_hat = bf(z[:, :SUP]).astype(f32) * bf(dw).astype(f32) + db
    recon = dot(dot(z, wd) + bd, wo) + bo
    return recon, y_hat, mu, logvar


if __name__ == "__main__":
    key = jax.random.PRNGKey(0)
    kx, keps, kp = jax.random.split(key, 3)
    # batch=300 pads to 512 -> grid (2,): exercises padding and gives both
    # v7x TensorCores a grid step.
    batch = 300
    x = jax.random.normal(kx, (batch, D), jnp.float32)
    # torch.randn_like noise is sampled inside forward; passed explicitly here.
    eps = jax.random.normal(keps, (batch, LATENT), jnp.float32)
    params = make_params(kp)
    w_slab, b_slab = pack_params(params)

    recon, y_hat, mu, logvar = psvae_forward(x, eps, w_slab, b_slab)
    jax.block_until_ready((recon, y_hat, mu, logvar))

    r_recon, r_yhat, r_mu, r_lv = psvae_reference(x, eps, params)
    assert jnp.allclose(mu, r_mu, atol=5e-3, rtol=5e-3), "mu mismatch"
    assert jnp.allclose(logvar, r_lv, atol=5e-3, rtol=5e-3), "logvar mismatch"
    assert jnp.allclose(y_hat, r_yhat, atol=5e-3, rtol=5e-3), "y_hat mismatch"
    assert jnp.allclose(recon, r_recon, atol=5e-3, rtol=5e-3), "recon mismatch"

    print("KERNEL_OK")
</pallas_src>

<mosaic_0001>
module attributes {stable_mosaic.version = 11 : i64} {
  func.func @psvae_kernel(%arg0: i32, %arg1: memref<256x256xbf16, #tpu.memory_space<vmem>>, %arg2: memref<768x128xbf16, #tpu.memory_space<vmem>>, %arg3: memref<8x128xf32, #tpu.memory_space<vmem>>, %arg4: memref<256x256xf32, #tpu.memory_space<vmem>>) attributes {dimension_semantics = [#tpu.dimension_semantics<parallel>], iteration_bounds = array<i64: 2>, scalar_prefetch = 0 : i64, scratch_operands = 0 : i64, tpu.core_type = #tpu.core_type<tc>, window_params = [{transform_indices = @transform_0, window_bounds = array<i64: 256, 256>}, {pipeline_mode = #tpu.pipeline_mode<synchronous>, transform_indices = @transform_1, window_bounds = array<i64: 768, 128>}, {pipeline_mode = #tpu.pipeline_mode<synchronous>, transform_indices = @transform_2, window_bounds = array<i64: 8, 128>}, {transform_indices = @transform_3, window_bounds = array<i64: 256, 256>}]} {
    %c0 = arith.constant 0 : index
    %c0_0 = arith.constant 0 : index
    %0 = vector.load %arg1[%c0, %c0_0] : memref<256x256xbf16, #tpu.memory_space<vmem>>, vector<256x128xbf16>
    %c0_1 = arith.constant 0 : index
    %c128 = arith.constant 128 : index
    %1 = vector.load %arg1[%c0_1, %c128] : memref<256x256xbf16, #tpu.memory_space<vmem>>, vector<256x128xbf16>
    %2 = arith.extf %1 : vector<256x128xbf16> to vector<256x128xf32>
    %c0_2 = arith.constant 0 : index
    %c0_3 = arith.constant 0 : index
    %3 = vector.load %arg3[%c0_2, %c0_3] : memref<8x128xf32, #tpu.memory_space<vmem>>, vector<1x128xf32>
    %c1 = arith.constant 1 : index
    %c0_4 = arith.constant 0 : index
    %4 = vector.load %arg3[%c1, %c0_4] : memref<8x128xf32, #tpu.memory_space<vmem>>, vector<1x128xf32>
    %c2 = arith.constant 2 : index
    %c0_5 = arith.constant 0 : index
    %5 = vector.load %arg3[%c2, %c0_5] : memref<8x128xf32, #tpu.memory_space<vmem>>, vector<1x128xf32>
    %c3 = arith.constant 3 : index
    %c0_6 = arith.constant 0 : index
    %6 = vector.load %arg3[%c3, %c0_6] : memref<8x128xf32, #tpu.memory_space<vmem>>, vector<1x128xf32>
    %c4 = arith.constant 4 : index
    %c0_7 = arith.constant 0 : index
    %7 = vector.load %arg3[%c4, %c0_7] : memref<8x128xf32, #tpu.memory_space<vmem>>, vector<1x128xf32>
    %c5 = arith.constant 5 : index
    %c0_8 = arith.constant 0 : index
    %8 = vector.load %arg3[%c5, %c0_8] : memref<8x128xf32, #tpu.memory_space<vmem>>, vector<1x128xf32>
    %c0_9 = arith.constant 0 : index
    %c0_10 = arith.constant 0 : index
    %9 = vector.load %arg2[%c0_9, %c0_10] : memref<768x128xbf16, #tpu.memory_space<vmem>>, vector<128x128xbf16>
    %c128_11 = arith.constant 128 : index
    %c0_12 = arith.constant 0 : index
    %10 = vector.load %arg2[%c128_11, %c0_12] : memref<768x128xbf16, #tpu.memory_space<vmem>>, vector<128x128xbf16>
    %c256 = arith.constant 256 : index
    %c0_13 = arith.constant 0 : index
    %11 = vector.load %arg2[%c256, %c0_13] : memref<768x128xbf16, #tpu.memory_space<vmem>>, vector<128x128xbf16>
    %c384 = arith.constant 384 : index
    %c0_14 = arith.constant 0 : index
    %12 = vector.load %arg2[%c384, %c0_14] : memref<768x128xbf16, #tpu.memory_space<vmem>>, vector<128x128xbf16>
    %c512 = arith.constant 512 : index
    %c0_15 = arith.constant 0 : index
    %13 = vector.load %arg2[%c512, %c0_15] : memref<768x128xbf16, #tpu.memory_space<vmem>>, vector<128x128xbf16>
    %c640 = arith.constant 640 : index
    %c0_16 = arith.constant 0 : index
    %14 = vector.load %arg2[%c640, %c0_16] : memref<768x128xbf16, #tpu.memory_space<vmem>>, vector<128x128xbf16>
    %cst = arith.constant dense<0.000000e+00> : vector<256x128xf32>
    %15 = tpu.matmul %0, %9, %cst {dimension_numbers = #tpu.dot_dimension_numbers<[1], [0], [0], [1], [0, 0, 1, 1], [], []>} : vector<256x128xbf16>, vector<128x128xbf16>, vector<256x128xf32> -> vector<256x128xf32>
    %16 = vector.broadcast %3 : vector<1x128xf32> to vector<256x128xf32>
    %17 = arith.addf %15, %16 : vector<256x128xf32>
    %cst_17 = arith.constant 0.000000e+00 : f32
    %18 = vector.broadcast %cst_17 : f32 to vector<256x128xf32>
    %19 = arith.maximumf %17, %18 : vector<256x128xf32>
    %20 = arith.truncf %19 : vector<256x128xf32> to vector<256x128xbf16>
    %cst_18 = arith.constant dense<0.000000e+00> : vector<256x128xf32>
    %21 = tpu.matmul %20, %10, %cst_18 {dimension_numbers = #tpu.dot_dimension_numbers<[1], [0], [0], [1], [0, 0, 1, 1], [], []>} : vector<256x128xbf16>, vector<128x128xbf16>, vector<256x128xf32> -> vector<256x128xf32>
    %22 = vector.broadcast %4 : vector<1x128xf32> to vector<256x128xf32>
    %23 = arith.addf %21, %22 : vector<256x128xf32>
    %cst_19 = arith.constant dense<0.000000e+00> : vector<256x128xf32>
    %24 = tpu.matmul %20, %11, %cst_19 {dimension_numbers = #tpu.dot_dimension_numbers<[1], [0], [0], [1], [0, 0, 1, 1], [], []>} : vector<256x128xbf16>, vector<128x128xbf16>, vector<256x128xf32> -> vector<256x128xf32>
    %25 = vector.broadcast %5 : vector<1x128xf32> to vector<256x128xf32>
    %26 = arith.addf %24, %25 : vector<256x128xf32>
    %cst_20 = arith.constant 5.000000e-01 : f32
    %27 = vector.broadcast %cst_20 : f32 to vector<256x128xf32>
    %28 = arith.mulf %27, %26 : vector<256x128xf32>
    %29 = math.exp %28 : vector<256x128xf32>
    %30 = arith.mulf %2, %29 : vector<256x128xf32>
    %31 = arith.addf %23, %30 : vector<256x128xf32>
    %32 = arith.truncf %31 : vector<256x128xf32> to vector<256x128xbf16>
    %cst_21 = arith.constant dense<0.000000e+00> : vector<256x128xf32>
    %33 = tpu.matmul %32, %12, %cst_21 {dimension_numbers = #tpu.dot_dimension_numbers<[1], [0], [0], [1], [0, 0, 1, 1], [], []>} : vector<256x128xbf16>, vector<128x128xbf16>, vector<256x128xf32> -> vector<256x128xf32>
    %34 = vector.broadcast %6 : vector<1x128xf32> to vector<256x128xf32>
    %35 = arith.addf %33, %34 : vector<256x128xf32>
    %cst_22 = arith.constant dense<0.000000e+00> : vector<256x128xf32>
    %36 = tpu.matmul %32, %13, %cst_22 {dimension_numbers = #tpu.dot_dimension_numbers<[1], [0], [0], [1], [0, 0, 1, 1], [], []>} : vector<256x128xbf16>, vector<128x128xbf16>, vector<256x128xf32> -> vector<256x128xf32>
    %37 = vector.broadcast %7 : vector<1x128xf32> to vector<256x128xf32>
    %38 = arith.addf %36, %37 : vector<256x128xf32>
    %39 = arith.truncf %38 : vector<256x128xf32> to vector<256x128xbf16>
    %cst_23 = arith.constant dense<0.000000e+00> : vector<256x128xf32>
    %40 = tpu.matmul %39, %14, %cst_23 {dimension_numbers = #tpu.dot_dimension_numbers<[1], [0], [0], [1], [0, 0, 1, 1], [], []>} : vector<256x128xbf16>, vector<128x128xbf16>, vector<256x128xf32> -> vector<256x128xf32>
    %41 = vector.broadcast %8 : vector<1x128xf32> to vector<256x128xf32>
    %42 = arith.addf %40, %41 : vector<256x128xf32>
    %c0_24 = arith.constant 0 : index
    %c0_25 = arith.constant 0 : index
    %43 = vector.load %arg4[%c0_24, %c0_25] : memref<256x256xf32, #tpu.memory_space<vmem>>, vector<256x128xf32>
    tpu.vector_store %arg4[%c0_24, %c0_25], %42 {strides = array<i32>} : memref<256x256xf32, #tpu.memory_space<vmem>>, vector<256x128xf32>,
    %44 = arith.addf %23, %35 : vector<256x128xf32>
    %c0_26 = arith.constant 0 : index
    %c128_27 = arith.constant 128 : index
    %45 = vector.load %arg4[%c0_26, %c128_27] : memref<256x256xf32, #tpu.memory_space<vmem>>, vector<256x128xf32>
    tpu.vector_store %arg4[%c0_26, %c128_27], %44 {strides = array<i32>} : memref<256x256xf32, #tpu.memory_space<vmem>>, vector<256x128xf32>,
    return
  }
  func.func @transform_0(%arg0: i32) -> (i32, i32) {
    %c0_i32 = arith.constant 0 : i32
    %c0_i32_0 = arith.constant 0 : i32
    return %arg0, %c0_i32 : i32, i32
  }
  func.func @transform_1(%arg0: i32) -> (i32, i32) {
    %c0_i32 = arith.constant 0 : i32
    %c0_i32_0 = arith.constant 0 : i32
    %c0_i32_1 = arith.constant 0 : i32
    return %c0_i32, %c0_i32_0 : i32, i32
  }
  func.func @transform_2(%arg0: i32) -> (i32, i32) {
    %c0_i32 = arith.constant 0 : i32
    %c0_i32_0 = arith.constant 0 : i32
    %c0_i32_1 = arith.constant 0 : i32
    return %c0_i32, %c0_i32_0 : i32, i32
  }
  func.func @transform_3(%arg0: i32) -> (i32, i32) {
    %c0_i32 = arith.constant 0 : i32
    %c0_i32_0 = arith.constant 0 : i32
    return %arg0, %c0_i32 : i32, i32
  }
}

</mosaic_0001>

<llo_original>
// kernel: tpu_custom_call.1
$region0: #{tpu_custom_call.1}
  #allocation0 [shape = 'u32[]', space=smem, size = 0x4, offset = 0x4, fixed_abs, tag = 'smem constant byte address 0x4 - core index']
  #allocation1 [shape = 'u32[72,128]{1,0:T(1,128)}', space=vmem, size = 0x9000, scoped, tag = 'internal scratch']
  %s0 = inlined_call_operand.hbm [shape: bf16[512,256], index: 0, kind: input, shape index: {}]
  %s1 = inlined_call_operand.hbm [shape: bf16[768,128], index: 1, kind: input, shape index: {}]
  %s2 = inlined_call_operand.hbm [shape: f32[8,128], index: 2, kind: input, shape index: {}]
  %s3 = inlined_call_operand.hbm [shape: f32[512,256], index: 3, kind: output, shape index: {}]
  %s4 = sld [smem:[#allocation0]]
  $region57: #{tpu_custom_call.1} parent=0
    _
  %s6 = ssub.s32 1, %s4
  %s7 = scalar_select 0, %s6, %s4
  $region1: #{tpu_custom_call.1} parent=0
    #allocation2 [shape = 'u8[262144]{0}', space=vmem, size = 0x40000, scoped, tag = 'input window, operand 0']
    #allocation3 [shape = 's32[2]{0}', space=sflag, size = 0x8, scoped, tag = 'scoped memory for tpu_custom_call.1']
    #allocation4 [shape = 's32[2]{0}', space=sflag, size = 0x8, scoped, tag = 'scoped memory for tpu_custom_call.1']
    #allocation5 [shape = 'u8[196608]{0}', space=vmem, size = 0x30000, scoped, tag = 'input window, operand 1, single buffered']
    #allocation6 [shape = 's32[1]{0}', space=sflag, size = 0x4, scoped, tag = 'scoped memory for tpu_custom_call.1']
    #allocation7 [shape = 'u8[4096]{0}', space=vmem, size = 0x1000, scoped, tag = 'input window, operand 2, single buffered']
    #allocation8 [shape = 'u8[524288]{0}', space=vmem, size = 0x80000, scoped, tag = 'output window, operand 0']
    %8 = vsyncpa [#allocation3], 0
    %s9 = scalar_lea.sflag [#allocation3], 1
    %10 = vsyncpa %s9, 0
    %11 = vsyncpa [#allocation6], 0
    %12 = vsyncpa [#allocation4], 0
    %s13 = scalar_lea.sflag [#allocation4], 1
    %14 = vsyncpa %s13, 0
    loop: start=0, step=1, limit=4
    $region2: #{tpu_custom_call.1} parent=1 // loop_pre_header
      _
    $region3: #{tpu_custom_call.1} parent=1 // loop_header
      %s16 = sphi 0, %s20
      %p17 = scmp.ge.s32.totalorder %s16, 4
      %s26 = sphi 0, %s28
      %s29 = sphi 0, %s26
      %s30 = sphi 0, %s29
      %s46 = sphi 0, %s30
      %s50 = sphi 0, %s50
      %s52 = sphi 0, %s50
      %s53 = sphi 0, %s52
      %s67 = sphi 0, %s53
      %s71 = sphi 0, %s71
      %s73 = sphi 0, %s71
      %s74 = sphi 0, %s73
      %s88 = sphi 0, %s74
      %s94 = sphi 0, %s96
      %s97 = sphi 0, %s94
      %s98 = sphi 0, %s97
      %s114 = sphi 0, %s98
    $region4: #{tpu_custom_call.1} parent=1 // loop_header_branch
      %19 = sbr.rel (%p17) target = $region8
    $region5: #{tpu_custom_call.1} parent=1 // loop_body
      %s21 = ssub.s32 %s16, 1
      %s22 = ssub.s32 %s16, 2
      %s23 = sadd.s32 %s16, 1
      %s24 = ssub.s32 %s16, %s23
      %p25 = scmp.eq.s32.totalorder %s24, 0
      %s27 = sadd.s32 %s26, 1
      %s28 = scalar_select %p25, %s26, %s27
      %p31 = pneg %p25
      %p32 = scmp.eq.s32.totalorder %s16, 1
      %p33 = por %p31, %p32
      %p34 = scmp.ne.s32.totalorder %s26, %s29
      %p35 = scmp.eq.s32.totalorder %s16, 0
      %p36 = por %p34, %p35
      %p37 = scmp.ne.s32.totalorder %s26, %s29
      %p38 = scmp.eq.s32.totalorder %s21, 1
      %p39 = por %p37, %p38
      %p40 = scmp.ne.s32.totalorder %s29, %s30
      %p41 = scmp.eq.s32.totalorder %s21, 0
      %p42 = por %p40, %p41
      %p43 = scmp.ne.s32.totalorder %s29, %s30
      %p44 = scmp.eq.s32.totalorder %s22, 1
      %p45 = por %p43, %p44
      %p47 = scmp.ne.s32.totalorder %s30, %s46
      %p48 = scmp.eq.s32.totalorder %s22, 0
      %p49 = por %p47, %p48
      %s51 = sadd.s32 %s50, 1
      %p54 = scmp.eq.s32.totalorder %s16, 1
      %p55 = scmp.ne.s32.totalorder %s50, %s52
      %p56 = scmp.eq.s32.totalorder %s16, 0
      %p57 = por %p55, %p56
      %p58 = scmp.ne.s32.totalorder %s50, %s52
      %p59 = scmp.eq.s32.totalorder %s21, 1
      %p60 = por %p58, %p59
      %p61 = scmp.ne.s32.totalorder %s52, %s53
      %p62 = scmp.eq.s32.totalorder %s21, 0
      %p63 = por %p61, %p62
      %p64 = scmp.ne.s32.totalorder %s52, %s53
      %p65 = scmp.eq.s32.totalorder %s22, 1
      %p66 = por %p64, %p65
      %p68 = scmp.ne.s32.totalorder %s53, %s67
      %p69 = scmp.eq.s32.totalorder %s22, 0
      %p70 = por %p68, %p69
      %s72 = sadd.s32 %s71, 1
      %p75 = scmp.eq.s32.totalorder %s16, 1
      %p76 = scmp.ne.s32.totalorder %s71, %s73
      %p77 = scmp.eq.s32.totalorder %s16, 0
      %p78 = por %p76, %p77
      %p79 = scmp.ne.s32.totalorder %s71, %s73
      %p80 = scmp.eq.s32.totalorder %s21, 1
      %p81 = por %p79, %p80
      %p82 = scmp.ne.s32.totalorder %s73, %s74
      %p83 = scmp.eq.s32.totalorder %s21, 0
      %p84 = por %p82, %p83
      %p85 = scmp.ne.s32.totalorder %s73, %s74
      %p86 = scmp.eq.s32.totalorder %s22, 1
      %p87 = por %p85, %p86
      %p89 = scmp.ne.s32.totalorder %s74, %s88
      %p90 = scmp.eq.s32.totalorder %s22, 0
      %p91 = por %p89, %p90
      %s92 = ssub.s32 %s16, %s23
      %p93 = scmp.eq.s32.totalorder %s92, 0
      %s95 = sadd.s32 %s94, 1
      %s96 = scalar_select %p93, %s94, %s95
      %p99 = pneg %p93
      %p100 = scmp.eq.s32.totalorder %s16, 1
      %p101 = por %p99, %p100
      %p102 = scmp.ne.s32.totalorder %s94, %s97
      %p103 = scmp.eq.s32.totalorder %s16, 0
      %p104 = por %p102, %p103
      %p105 = scmp.ne.s32.totalorder %s94, %s97
      %p106 = scmp.eq.s32.totalorder %s21, 1
      %p107 = por %p105, %p106
      %p108 = scmp.ne.s32.totalorder %s97, %s98
      %p109 = scmp.eq.s32.totalorder %s21, 0
      %p110 = por %p108, %p109
      %p111 = scmp.ne.s32.totalorder %s97, %s98
      %p112 = scmp.eq.s32.totalorder %s22, 1
      %p113 = por %p111, %p112
      %p115 = scmp.ne.s32.totalorder %s98, %s114
      %p116 = scmp.eq.s32.totalorder %s22, 0
      %p117 = por %p115, %p116
      %p118 = scmp.le.s32.totalorder 1, %s16
      %p119 = scmp.lt.s32.totalorder %s16, 3
      %p120 = pnand %p118, %p119
      %p121 = pneg %p120
      // Predicated region
      $region9: #{tpu_custom_call.1} parent=5 // pred_check
        _
      $region10: #{tpu_custom_call.1} parent=5 // pred_check_branch
        %123 = sbr.rel (%p120) target = $region12
      $region11: #{tpu_custom_call.1} parent=5 // pred_region
        %s124 = ssub.s32 %s16, 1
        // Predicated region
        $region13: #{tpu_custom_call.1} parent=11 // pred_check
          %p125 = pneg %p63
        $region14: #{tpu_custom_call.1} parent=11 // pred_check_branch
          %127 = sbr.rel (%p125) target = $region16
        $region15: #{tpu_custom_call.1} parent=11 // pred_region
          %129 = vsyncadd [#allocation6], 0
          %s130 = sshll.u32 %s1, 4
          %s131 = int_to_ptr.hbm [resolvable:$true] %s130
          %s132 = sshll.u32 [#allocation5], 4
          %s133 = int_to_ptr.vmem [resolvable:$true] %s132
          %138 = dma.hbm_to_vmem [thread:$0]  %s131, 6144, %s133, [#allocation6], 64, 64, 4
        $region16: #{tpu_custom_call.1} parent=11 // pred_fallthru
          _
        // Predicated region
        $region17: #{tpu_custom_call.1} parent=11 // pred_check
          %p139 = pneg %p84
        $region18: #{tpu_custom_call.1} parent=11 // pred_check_branch
          %141 = sbr.rel (%p139) target = $region20
        $region19: #{tpu_custom_call.1} parent=11 // pred_region
          %143 = vsyncadd [#allocation6], 0
          %s145 = sshll.u32 %s2, 4
          %s146 = int_to_ptr.hbm [resolvable:$true] %s145
          %s147 = sshll.u32 [#allocation7], 4
          %s148 = int_to_ptr.vmem [resolvable:$true] %s147
          %150 = dma.hbm_to_vmem [thread:$0]  %s146, 128, %s148, [#allocation6]
        $region20: #{tpu_custom_call.1} parent=11 // pred_fallthru
          _
      $region12: #{tpu_custom_call.1} parent=5 // pred_fallthru
        _
      %p151 = scmp.lt.s32.totalorder %s16, 2
      // Predicated region
      $region21: #{tpu_custom_call.1} parent=5 // pred_check
        %p152 = pneg %p151
      $region22: #{tpu_custom_call.1} parent=5 // pred_check_branch
        %154 = sbr.rel (%p152) target = $region24
      $region23: #{tpu_custom_call.1} parent=5 // pred_region
        // Predicated region
        $region25: #{tpu_custom_call.1} parent=23 // pred_check
          %p155 = pneg %p36
        $region26: #{tpu_custom_call.1} parent=23 // pred_check_branch
          %157 = sbr.rel (%p155) target = $region28
        $region27: #{tpu_custom_call.1} parent=23 // pred_region
          %s158 = sand.u32 %s26, 1
          %s159 = scalar_lea.sflag [#allocation3], %s158
          %s160 = sand.u32 %s26, 1
          %s161 = smul.addr %s160, 256
          %s162 = scalar_lea.vmem [#allocation2], %s161
          %s163 = smul.u32 32, %s16
          %165 = vsyncadd %s159, 0
          %s166 = smul.addr %s163, 2
          %s167 = smul.addr %s166, 4
          %s168 = scalar_lea.hbm %s0, %s167
          %s169 = sshll.u32 %s168, 4
          %s170 = int_to_ptr.hbm [resolvable:$true] %s169
          %s171 = sshll.u32 %s162, 4
          %s172 = int_to_ptr.vmem [resolvable:$true] %s171
          %177 = dma.hbm_to_vmem [thread:$0]  %s170, 4096, %s172, %s159, 128, 128, 8
        $region28: #{tpu_custom_call.1} parent=23 // pred_fallthru
          _
      $region24: #{tpu_custom_call.1} parent=5 // pred_fallthru
        _
      %p178 = scmp.le.s32.totalorder 1, %s16
      %p179 = scmp.lt.s32.totalorder %s16, 3
      %p180 = pnand %p178, %p179
      %p181 = pneg %p180
      // Predicated region
      $region29: #{tpu_custom_call.1} parent=5 // pred_check
        _
      $region30: #{tpu_custom_call.1} parent=5 // pred_check_branch
        %183 = sbr.rel (%p180) target = $region32
      $region31: #{tpu_custom_call.1} parent=5 // pred_region
        %s184 = ssub.s32 %s16, 1
        %s185 = sand.u32 %s29, 1
        %s186 = scalar_lea.sflag [#allocation3], %s185
        %s187 = sand.u32 %s29, 1
        %s188 = smul.addr %s187, 256
        %s189 = scalar_lea.vmem [#allocation2], %s188
        // Predicated region
        $region33: #{tpu_custom_call.1} parent=31 // pred_check
          %p190 = pneg %p42
        $region34: #{tpu_custom_call.1} parent=31 // pred_check_branch
          %192 = sbr.rel (%p190) target = $region36
        $region35: #{tpu_custom_call.1} parent=31 // pred_region
          %194 = dma.done %s186, 4096
        $region36: #{tpu_custom_call.1} parent=31 // pred_fallthru
          _
        // Predicated region
        $region37: #{tpu_custom_call.1} parent=31 // pred_check
          %p195 = pneg %p63
        $region38: #{tpu_custom_call.1} parent=31 // pred_check_branch
          %197 = sbr.rel (%p195) target = $region40
        $region39: #{tpu_custom_call.1} parent=31 // pred_region
          %199 = dma.done [#allocation6], 6144
        $region40: #{tpu_custom_call.1} parent=31 // pred_fallthru
          _
        // Predicated region
        $region41: #{tpu_custom_call.1} parent=31 // pred_check
          %p200 = pneg %p84
        $region42: #{tpu_custom_call.1} parent=31 // pred_check_branch
          %202 = sbr.rel (%p200) target = $region44
        $region43: #{tpu_custom_call.1} parent=31 // pred_region
          %204 = dma.done [#allocation6], 128
        $region44: #{tpu_custom_call.1} parent=31 // pred_fallthru
          _
        %s205 = sand.u32 %s29, 1
        %s206 = scalar_lea.sflag [#allocation3], %s205
        %s207 = sand.u32 %s29, 1
        %s208 = smul.addr %s207, 256
        %s209 = scalar_lea.vmem [#allocation2], %s208
        %p210 = pneg %p42
        %p211 = pneg %p39
        %p212 = pneg %p63
        %p213 = pneg %p60
        %p214 = pneg %p84
        %p215 = pneg %p81
        %p216 = pneg %p110
        %p217 = pneg %p107
        %s218 = sand.u32 %s97, 1
        %s219 = scalar_lea.sflag [#allocation4], %s218
        %s220 = sand.u32 %s97, 1
        %s221 = smul.addr %s220, 512
        %s222 = scalar_lea.vmem [#allocation8], %s221
        %s223 = smul.u32 32, %s21
        %s224 = smul.u32 32, %s21
        %v225 = vld [vmem:[%s189] sm:$0xf]
        %v226 = vld [vmem:[%s189 + $0x8] sm:$0xf]
        %v227 = vld [vmem:[%s189 + $0x10] sm:$0xf]
        %v228 = vld [vmem:[%s189 + $0x18] sm:$0xf]
        %v229 = vld [vmem:[%s189 + $0x20] sm:$0xf]
        %v230 = vld [vmem:[%s189 + $0x28] sm:$0xf]
        %v231 = vld [vmem:[%s189 + $0x30] sm:$0xf]
        %v232 = vld [vmem:[%s189 + $0x38] sm:$0xf]
        %v233 = vld [vmem:[%s189 + $0x40] sm:$0xf]
        %v234 = vld [vmem:[%s189 + $0x48] sm:$0xf]
        %v235 = vld [vmem:[%s189 + $0x50] sm:$0xf]
        %v236 = vld [vmem:[%s189 + $0x58] sm:$0xf]
        %v237 = vld [vmem:[%s189 + $0x60] sm:$0xf]
        %v238 = vld [vmem:[%s189 + $0x68] sm:$0xf]
        %v239 = vld [vmem:[%s189 + $0x70] sm:$0xf]
        %v240 = vld [vmem:[%s189 + $0x78] sm:$0xf]
        %v241 = vld [vmem:[%s189 + $0x80] sm:$0xf]
        %v242 = vld [vmem:[%s189 + $0x88] sm:$0xf]
        %v243 = vld [vmem:[%s189 + $0x90] sm:$0xf]
        %v244 = vld [vmem:[%s189 + $0x98] sm:$0xf]
        %v245 = vld [vmem:[%s189 + $0xa0] sm:$0xf]
        %v246 = vld [vmem:[%s189 + $0xa8] sm:$0xf]
        %v247 = vld [vmem:[%s189 + $0xb0] sm:$0xf]
        %v248 = vld [vmem:[%s189 + $0xb8] sm:$0xf]
        %v249 = vld [vmem:[%s189 + $0xc0] sm:$0xf]
        %v250 = vld [vmem:[%s189 + $0xc8] sm:$0xf]
        %v251 = vld [vmem:[%s189 + $0xd0] sm:$0xf]
        %v252 = vld [vmem:[%s189 + $0xd8] sm:$0xf]
        %v253 = vld [vmem:[%s189 + $0xe0] sm:$0xf]
        %v254 = vld [vmem:[%s189 + $0xe8] sm:$0xf]
        %v255 = vld [vmem:[%s189 + $0xf0] sm:$0xf]
        %v256 = vld [vmem:[%s189 + $0xf8] sm:$0xf]
        %v257 = vld [vmem:[%s189 + $0x4] sm:$0xf]
        %v258 = vld [vmem:[%s189 + $0xc] sm:$0xf]
        %v259 = vld [vmem:[%s189 + $0x14] sm:$0xf]
        %v260 = vld [vmem:[%s189 + $0x1c] sm:$0xf]
        %v261 = vld [vmem:[%s189 + $0x24] sm:$0xf]
        %v262 = vld [vmem:[%s189 + $0x2c] sm:$0xf]
        %v263 = vld [vmem:[%s189 + $0x34] sm:$0xf]
        %v264 = vld [vmem:[%s189 + $0x3c] sm:$0xf]
        %v265 = vld [vmem:[%s189 + $0x44] sm:$0xf]
        %v266 = vld [vmem:[%s189 + $0x4c] sm:$0xf]
        %v267 = vld [vmem:[%s189 + $0x54] sm:$0xf]
        %v268 = vld [vmem:[%s189 + $0x5c] sm:$0xf]
        %v269 = vld [vmem:[%s189 + $0x64] sm:$0xf]
        %v270 = vld [vmem:[%s189 + $0x6c] sm:$0xf]
        %v271 = vld [vmem:[%s189 + $0x74] sm:$0xf]
        %v272 = vld [vmem:[%s189 + $0x7c] sm:$0xf]
        %v273 = vld [vmem:[%s189 + $0x84] sm:$0xf]
        %v274 = vld [vmem:[%s189 + $0x8c] sm:$0xf]
        %v275 = vld [vmem:[%s189 + $0x94] sm:$0xf]
        %v276 = vld [vmem:[%s189 + $0x9c] sm:$0xf]
        %v277 = vld [vmem:[%s189 + $0xa4] sm:$0xf]
        %v278 = vld [vmem:[%s189 + $0xac] sm:$0xf]
        %v279 = vld [vmem:[%s189 + $0xb4] sm:$0xf]
        %v280 = vld [vmem:[%s189 + $0xbc] sm:$0xf]
        %v281 = vld [vmem:[%s189 + $0xc4] sm:$0xf]
        %v282 = vld [vmem:[%s189 + $0xcc] sm:$0xf]
        %v283 = vld [vmem:[%s189 + $0xd4] sm:$0xf]
        %v284 = vld [vmem:[%s189 + $0xdc] sm:$0xf]
        %v285 = vld [vmem:[%s189 + $0xe4] sm:$0xf]
        %v286 = vld [vmem:[%s189 + $0xec] sm:$0xf]
        %v287 = vld [vmem:[%s189 + $0xf4] sm:$0xf]
        %v288 = vld [vmem:[%s189 + $0xfc] sm:$0xf]
        %v289 = vunpack.c.l.bf16 %v257
        %v290 = vunpack.c.l.bf16 %v258
        %v291 = vunpack.c.l.bf16 %v259
        %v292 = vunpack.c.l.bf16 %v260
        %v293 = vunpack.c.l.bf16 %v261
        %v294 = vunpack.c.l.bf16 %v262
        %v295 = vunpack.c.l.bf16 %v263
        %v296 = vunpack.c.l.bf16 %v264
        %v297 = vunpack.c.l.bf16 %v265
        %v298 = vunpack.c.l.bf16 %v266
        %v299 = vunpack.c.l.bf16 %v267
        %v300 = vunpack.c.l.bf16 %v268
        %v301 = vunpack.c.l.bf16 %v269
        %v302 = vunpack.c.l.bf16 %v270
        %v303 = vunpack.c.l.bf16 %v271
        %v304 = vunpack.c.l.bf16 %v272
        %v305 = vunpack.c.l.bf16 %v273
        %v306 = vunpack.c.l.bf16 %v274
        %v307 = vunpack.c.l.bf16 %v275
        %v308 = vunpack.c.l.bf16 %v276
        %v309 = vunpack.c.l.bf16 %v277
        %v310 = vunpack.c.l.bf16 %v278
        %v311 = vunpack.c.l.bf16 %v279
        %v312 = vunpack.c.l.bf16 %v280
        %v313 = vunpack.c.l.bf16 %v281
        %v314 = vunpack.c.l.bf16 %v282
        %v315 = vunpack.c.l.bf16 %v283
        %v316 = vunpack.c.l.bf16 %v284
        %v317 = vunpack.c.l.bf16 %v285
        %v318 = vunpack.c.l.bf16 %v286
        %v319 = vunpack.c.l.bf16 %v287
        %v320 = vunpack.c.l.bf16 %v288
        %v321 = vld [vmem:[#allocation7] sm:$0x1]
        %v322 = vld [vmem:[#allocation7 + $0x1] sm:$0x1]
        %v323 = vld [vmem:[#allocation7 + $0x2] sm:$0x1]
        %v324 = vld [vmem:[#allocation7 + $0x3] sm:$0x1]
        %v325 = vld [vmem:[#allocation7 + $0x4] sm:$0x1]
        %v326 = vld [vmem:[#allocation7 + $0x5] sm:$0x1]
        %v327 = vld [vmem:[#allocation5] sm:$0xf]
        %v328 = vld [vmem:[#allocation5 + $0x4] sm:$0xf]
        %v329 = vld [vmem:[#allocation5 + $0x8] sm:$0xf]
        %v330 = vld [vmem:[#allocation5 + $0xc] sm:$0xf]
        %v331 = vld [vmem:[#allocation5 + $0x10] sm:$0xf]
        %v332 = vld [vmem:[#allocation5 + $0x14] sm:$0xf]
        %v333 = vld [vmem:[#allocation5 + $0x18] sm:$0xf]
        %v334 = vld [vmem:[#allocation5 + $0x1c] sm:$0xf]
        %v335 = vld [vmem:[#allocation5 + $0x20] sm:$0xf]
        %v336 = vld [vmem:[#allocation5 + $0x24] sm:$0xf]
        %v337 = vld [vmem:[#allocation5 + $0x28] sm:$0xf]
        %v338 = vld [vmem:[#allocation5 + $0x2c] sm:$0xf]
        %v339 = vld [vmem:[#allocation5 + $0x30] sm:$0xf]
        %v340 = vld [vmem:[#allocation5 + $0x34] sm:$0xf]
        %v341 = vld [vmem:[#allocation5 + $0x38] sm:$0xf]
        %v342 = vld [vmem:[#allocation5 + $0x3c] sm:$0xf]
        %v343 = vld [vmem:[#allocation5 + $0x40] sm:$0xf]
        %v344 = vld [vmem:[#allocation5 + $0x44] sm:$0xf]
        %v345 = vld [vmem:[#allocation5 + $0x48] sm:$0xf]
        %v346 = vld [vmem:[#allocation5 + $0x4c] sm:$0xf]
        %v347 = vld [vmem:[#allocation5 + $0x50] sm:$0xf]
        %v348 = vld [vmem:[#allocation5 + $0x54] sm:$0xf]
        %v349 = vld [vmem:[#allocation5 + $0x58] sm:$0xf]
        %v350 = vld [vmem:[#allocation5 + $0x5c] sm:$0xf]
        %v351 = vld [vmem:[#allocation5 + $0x60] sm:$0xf]
        %v352 = vld [vmem:[#allocation5 + $0x64] sm:$0xf]
        %v353 = vld [vmem:[#allocation5 + $0x68] sm:$0xf]
        %v354 = vld [vmem:[#allocation5 + $0x6c] sm:$0xf]
        %v355 = vld [vmem:[#allocation5 + $0x70] sm:$0xf]
        %v356 = vld [vmem:[#allocation5 + $0x74] sm:$0xf]
        %v357 = vld [vmem:[#allocation5 + $0x78] sm:$0xf]
        %v358 = vld [vmem:[#allocation5 + $0x7c] sm:$0xf]
        %v359 = vld [vmem:[#allocation5 + $0x80] sm:$0xf]
        %v360 = vld [vmem:[#allocation5 + $0x84] sm:$0xf]
        %v361 = vld [vmem:[#allocation5 + $0x88] sm:$0xf]
        %v362 = vld [vmem:[#allocation5 + $0x8c] sm:$0xf]
        %v363 = vld [vmem:[#allocation5 + $0x90] sm:$0xf]
        %v364 = vld [vmem:[#allocation5 + $0x94] sm:$0xf]
        %v365 = vld [vmem:[#allocation5 + $0x98] sm:$0xf]
        %v366 = vld [vmem:[#allocation5 + $0x9c] sm:$0xf]
        %v367 = vld [vmem:[#allocation5 + $0xa0] sm:$0xf]
        %v368 = vld [vmem:[#allocation5 + $0xa4] sm:$0xf]
        %v369 = vld [vmem:[#allocation5 + $0xa8] sm:$0xf]
        %v370 = vld [vmem:[#allocation5 + $0xac] sm:$0xf]
        %v371 = vld [vmem:[#allocation5 + $0xb0] sm:$0xf]
        %v372 = vld [vmem:[#allocation5 + $0xb4] sm:$0xf]
        %v373 = vld [vmem:[#allocation5 + $0xb8] sm:$0xf]
        %v374 = vld [vmem:[#allocation5 + $0xbc] sm:$0xf]
        %v375 = vld [vmem:[#allocation5 + $0xc0] sm:$0xf]
        %v376 = vld [vmem:[#allocation5 + $0xc4] sm:$0xf]
        %v377 = vld [vmem:[#allocation5 + $0xc8] sm:$0xf]
        %v378 = vld [vmem:[#allocation5 + $0xcc] sm:$0xf]
        %v379 = vld [vmem:[#allocation5 + $0xd0] sm:$0xf]
        %v380 = vld [vmem:[#allocation5 + $0xd4] sm:$0xf]
        %v381 = vld [vmem:[#allocation5 + $0xd8] sm:$0xf]
        %v382 = vld [vmem:[#allocation5 + $0xdc] sm:$0xf]
        %v383 = vld [vmem:[#allocation5 + $0xe0] sm:$0xf]
        %v384 = vld [vmem:[#allocation5 + $0xe4] sm:$0xf]
        %v385 = vld [vmem:[#allocation5 + $0xe8] sm:$0xf]
        %v386 = vld [vmem:[#allocation5 + $0xec] sm:$0xf]
        %v387 = vld [vmem:[#allocation5 + $0xf0] sm:$0xf]
        %v388 = vld [vmem:[#allocation5 + $0xf4] sm:$0xf]
        %v389 = vld [vmem:[#allocation5 + $0xf8] sm:$0xf]
        %v390 = vld [vmem:[#allocation5 + $0xfc] sm:$0xf]
        %v391 = vld [vmem:[#allocation5 + $0x100] sm:$0xf]
        %v392 = vld [vmem:[#allocation5 + $0x104] sm:$0xf]
        %v393 = vld [vmem:[#allocation5 + $0x108] sm:$0xf]
        %v394 = vld [vmem:[#allocation5 + $0x10c] sm:$0xf]
        %v395 = vld [vmem:[#allocation5 + $0x110] sm:$0xf]
        %v396 = vld [vmem:[#allocation5 + $0x114] sm:$0xf]
        %v397 = vld [vmem:[#allocation5 + $0x118] sm:$0xf]
        %v398 = vld [vmem:[#allocation5 + $0x11c] sm:$0xf]
        %v399 = vld [vmem:[#allocation5 + $0x120] sm:$0xf]
        %v400 = vld [vmem:[#allocation5 + $0x124] sm:$0xf]
        %v401 = vld [vmem:[#allocation5 + $0x128] sm:$0xf]
        %v402 = vld [vmem:[#allocation5 + $0x12c] sm:$0xf]
        %v403 = vld [vmem:[#allocation5 + $0x130] sm:$0xf]
        %v404 = vld [vmem:[#allocation5 + $0x134] sm:$0xf]
        %v405 = vld [vmem:[#allocation5 + $0x138] sm:$0xf]
        %v406 = vld [vmem:[#allocation5 + $0x13c] sm:$0xf]
        %v407 = vld [vmem:[#allocation5 + $0x140] sm:$0xf]
        %v408 = vld [vmem:[#allocation5 + $0x144] sm:$0xf]
        %v409 = vld [vmem:[#allocation5 + $0x148] sm:$0xf]
        %v410 = vld [vmem:[#allocation5 + $0x14c] sm:$0xf]
        %v411 = vld [vmem:[#allocation5 + $0x150] sm:$0xf]
        %v412 = vld [vmem:[#allocation5 + $0x154] sm:$0xf]
        %v413 = vld [vmem:[#allocation5 + $0x158] sm:$0xf]
        %v414 = vld [vmem:[#allocation5 + $0x15c] sm:$0xf]
        %v415 = vld [vmem:[#allocation5 + $0x160] sm:$0xf]
        %v416 = vld [vmem:[#allocation5 + $0x164] sm:$0xf]
        %v417 = vld [vmem:[#allocation5 + $0x168] sm:$0xf]
        %v418 = vld [vmem:[#allocation5 + $0x16c] sm:$0xf]
        %v419 = vld [vmem:[#allocation5 + $0x170] sm:$0xf]
        %v420 = vld [vmem:[#allocation5 + $0x174] sm:$0xf]
        %v421 = vld [vmem:[#allocation5 + $0x178] sm:$0xf]
        %v422 = vld [vmem:[#allocation5 + $0x17c] sm:$0xf]
        %v423 = vperm.slane %v321, 0
        %v456 = vunpack.c.l.b16 %v225
        %v457 = vunpack.c.l.b16 %v226
        %v458 = vunpack.c.l.b16 %v227
        %v459 = vunpack.c.l.b16 %v228
        %v460 = vunpack.c.l.b16 %v229
        %v461 = vunpack.c.l.b16 %v230
        %v462 = vunpack.c.l.b16 %v231
        %v463 = vunpack.c.l.b16 %v232
        %v464 = vunpack.c.l.b16 %v233
        %v465 = vunpack.c.l.b16 %v234
        %v466 = vunpack.c.l.b16 %v235
        %v467 = vunpack.c.l.b16 %v236
        %v468 = vunpack.c.l.b16 %v237
        %v469 = vunpack.c.l.b16 %v238
        %v470 = vunpack.c.l.b16 %v239
        %v471 = vunpack.c.l.b16 %v240
        %v472 = vunpack.c.l.b16 %v241
        %v473 = vunpack.c.l.b16 %v242
        %v474 = vunpack.c.l.b16 %v243
        %v475 = vunpack.c.l.b16 %v244
        %v476 = vunpack.c.l.b16 %v245
        %v477 = vunpack.c.l.b16 %v246
        %v478 = vunpack.c.l.b16 %v247
        %v479 = vunpack.c.l.b16 %v248
        %v480 = vunpack.c.l.b16 %v249
        %v481 = vunpack.c.l.b16 %v250
        %v482 = vunpack.c.l.b16 %v251
        %v483 = vunpack.c.l.b16 %v252
        %v484 = vunpack.c.l.b16 %v253
        %v485 = vunpack.c.l.b16 %v254
        %v486 = vunpack.c.l.b16 %v255
        %v487 = vunpack.c.l.b16 %v256
        %v488 = vpack.c.b16 %v457, %v456
        %v489 = vpack.c.b16 %v459, %v458
        %v490 = vpack.c.b16 %v461, %v460
        %v491 = vpack.c.b16 %v463, %v462
        %v492 = vpack.c.b16 %v465, %v464
        %v493 = vpack.c.b16 %v467, %v466
        %v494 = vpack.c.b16 %v469, %v468
        %v495 = vpack.c.b16 %v471, %v470
        %v496 = vpack.c.b16 %v473, %v472
        %v497 = vpack.c.b16 %v475, %v474
        %v498 = vpack.c.b16 %v477, %v476
        %v499 = vpack.c.b16 %v479, %v478
        %v500 = vpack.c.b16 %v481, %v480
        %v501 = vpack.c.b16 %v483, %v482
        %v502 = vpack.c.b16 %v485, %v484
        %v503 = vpack.c.b16 %v487, %v486
        %v536 = vunpack.c.l.b16 %v327
        %v537 = vunpack.c.l.b16 %v328
        %v538 = vunpack.c.l.b16 %v329
        %v539 = vunpack.c.l.b16 %v330
        %v540 = vunpack.c.l.b16 %v331
        %v541 = vunpack.c.l.b16 %v332
        %v542 = vunpack.c.l.b16 %v333
        %v543 = vunpack.c.l.b16 %v334
        %v544 = vunpack.c.l.b16 %v335
        %v545 = vunpack.c.l.b16 %v336
        %v546 = vunpack.c.l.b16 %v337
        %v547 = vunpack.c.l.b16 %v338
        %v548 = vunpack.c.l.b16 %v339
        %v549 = vunpack.c.l.b16 %v340
        %v550 = vunpack.c.l.b16 %v341
        %v551 = vunpack.c.l.b16 %v342
        %v552 = vpack.c.b16 %v537, %v536
        %v553 = vpack.c.b16 %v539, %v538
        %v554 = vpack.c.b16 %v541, %v540
        %v555 = vpack.c.b16 %v543, %v542
        %v556 = vpack.c.b16 %v545, %v544
        %v557 = vpack.c.b16 %v547, %v546
        %v558 = vpack.c.b16 %v549, %v548
        %v559 = vpack.c.b16 %v551, %v550
        %568 = vmatpush.bf16.msra.mxu0 %v559
        %569 = vmatpush.bf16.msra.mxu0 %v558
        %570 = vmatpush.bf16.msra.mxu0 %v557
        %571 = vmatpush.bf16.msra.mxu0 %v556
        %572 = vmatpush.bf16.msra.mxu0 %v555
        %573 = vmatpush.bf16.msra.mxu0 %v554
        %574 = vmatpush.bf16.msra.mxu0 %v553
        %575 = vmatpush.bf16.msra.mxu0 %v552
        %576 = vmatmul.bf16.gmra.mxu0 %v488
        %v577 = vpop.f32.mrf.mxu0
        %v578 = vadd.f32 %v423, %v577
        %v579 = vpop.f32.mrf.mxu0
        %v580 = vadd.f32 %v423, %v579
        %581 = vmatmul.bf16.gmra.mxu0 %v489
        %v582 = vpop.f32.mrf.mxu0
        %v583 = vadd.f32 %v423, %v582
        %v584 = vpop.f32.mrf.mxu0
        %v585 = vadd.f32 %v423, %v584
        %586 = vmatmul.bf16.gmra.mxu0 %v490
        %v587 = vpop.f32.mrf.mxu0
        %v588 = vadd.f32 %v423, %v587
        %v589 = vpop.f32.mrf.mxu0
        %v590 = vadd.f32 %v423, %v589
        %591 = vmatmul.bf16.gmra.mxu0 %v491
        %v592 = vpop.f32.mrf.mxu0
        %v593 = vadd.f32 %v423, %v592
        %v594 = vpop.f32.mrf.mxu0
        %v595 = vadd.f32 %v423, %v594
        %596 = vmatmul.bf16.gmra.mxu0 %v492
        %v597 = vpop.f32.mrf.mxu0
        %v598 = vadd.f32 %v423, %v597
        %v599 = vpop.f32.mrf.mxu0
        %v600 = vadd.f32 %v423, %v599
        %601 = vmatmul.bf16.gmra.mxu0 %v493
        %v602 = vpop.f32.mrf.mxu0
        %v603 = vadd.f32 %v423, %v602
        %v604 = vpop.f32.mrf.mxu0
        %v605 = vadd.f32 %v423, %v604
        %606 = vmatmul.bf16.gmra.mxu0 %v494
        %v607 = vpop.f32.mrf.mxu0
        %v608 = vadd.f32 %v423, %v607
        %v609 = vpop.f32.mrf.mxu0
        %v610 = vadd.f32 %v423, %v609
        %611 = vmatmul.bf16.gmra.mxu0 %v495
        %v612 = vpop.f32.mrf.mxu0
        %v613 = vadd.f32 %v423, %v612
        %v614 = vpop.f32.mrf.mxu0
        %v615 = vadd.f32 %v423, %v614
        %616 = vmatmul.bf16.gmra.mxu0 %v496
        %v617 = vpop.f32.mrf.mxu0
        %v618 = vadd.f32 %v423, %v617
        %v619 = vpop.f32.mrf.mxu0
        %v620 = vadd.f32 %v423, %v619
        %621 = vmatmul.bf16.gmra.mxu0 %v497
        %v622 = vpop.f32.mrf.mxu0
        %v623 = vadd.f32 %v423, %v622
        %v624 = vpop.f32.mrf.mxu0
        %v625 = vadd.f32 %v423, %v624
        %626 = vmatmul.bf16.gmra.mxu0 %v498
        %v627 = vpop.f32.mrf.mxu0
        %v628 = vadd.f32 %v423, %v627
        %v629 = vpop.f32.mrf.mxu0
        %v630 = vadd.f32 %v423, %v629
        %631 = vmatmul.bf16.gmra.mxu0 %v499
        %v632 = vpop.f32.mrf.mxu0
        %v633 = vadd.f32 %v423, %v632
        %v634 = vpop.f32.mrf.mxu0
        %v635 = vadd.f32 %v423, %v634
        %636 = vmatmul.bf16.gmra.mxu0 %v500
        %v637 = vpop.f32.mrf.mxu0
        %v638 = vadd.f32 %v423, %v637
        %v639 = vpop.f32.mrf.mxu0
        %v640 = vadd.f32 %v423, %v639
        %641 = vmatmul.bf16.gmra.mxu0 %v501
        %v642 = vpop.f32.mrf.mxu0
        %v643 = vadd.f32 %v423, %v642
        %v644 = vpop.f32.mrf.mxu0
        %v645 = vadd.f32 %v423, %v644
        %646 = vmatmul.bf16.gmra.mxu0 %v502
        %v647 = vpop.f32.mrf.mxu0
        %v648 = vadd.f32 %v423, %v647
        %v649 = vpop.f32.mrf.mxu0
        %v650 = vadd.f32 %v423, %v649
        %651 = vmatmul.bf16.gmra.mxu0 %v503
        %v652 = vpop.f32.mrf.mxu0
        %v653 = vadd.f32 %v423, %v652
        %v654 = vpop.f32.mrf.mxu0
        %v655 = vadd.f32 %v423, %v654
        %656 = vdwg.mxu0
        %v657 = vmax.f32 %v578, 0.0
        %v658 = vmax.f32 %v580, 0.0
        %v659 = vmax.f32 %v583, 0.0
        %v660 = vmax.f32 %v585, 0.0
        %v661 = vmax.f32 %v588, 0.0
        %v662 = vmax.f32 %v590, 0.0
        %v663 = vmax.f32 %v593, 0.0
        %v664 = vmax.f32 %v595, 0.0
        %v665 = vmax.f32 %v598, 0.0
        %v666 = vmax.f32 %v600, 0.0
        %v667 = vmax.f32 %v603, 0.0
        %v668 = vmax.f32 %v605, 0.0
        %v669 = vmax.f32 %v608, 0.0
        %v670 = vmax.f32 %v610, 0.0
        %v671 = vmax.f32 %v613, 0.0
        %v672 = vmax.f32 %v615, 0.0
        %v673 = vmax.f32 %v618, 0.0
        %v674 = vmax.f32 %v620, 0.0
        %v675 = vmax.f32 %v623, 0.0
        %v676 = vmax.f32 %v625, 0.0
        %v677 = vmax.f32 %v628, 0.0
        %v678 = vmax.f32 %v630, 0.0
        %v679 = vmax.f32 %v633, 0.0
        %v680 = vmax.f32 %v635, 0.0
        %v681 = vmax.f32 %v638, 0.0
        %v682 = vmax.f32 %v640, 0.0
        %v683 = vmax.f32 %v643, 0.0
        %v684 = vmax.f32 %v645, 0.0
        %v685 = vmax.f32 %v648, 0.0
        %v686 = vmax.f32 %v650, 0.0
        %v687 = vmax.f32 %v653, 0.0
        %v688 = vmax.f32 %v655, 0.0
        %v689 = vpack.c.bf16 %v658, %v657
        %v690 = vpack.c.bf16 %v660, %v659
        %v691 = vpack.c.bf16 %v662, %v661
        %v692 = vpack.c.bf16 %v664, %v663
        %v693 = vpack.c.bf16 %v666, %v665
        %v694 = vpack.c.bf16 %v668, %v667
        %v695 = vpack.c.bf16 %v670, %v669
        %v696 = vpack.c.bf16 %v672, %v671
        %v697 = vpack.c.bf16 %v674, %v673
        %v698 = vpack.c.bf16 %v676, %v675
        %v699 = vpack.c.bf16 %v678, %v677
        %v700 = vpack.c.bf16 %v680, %v679
        %v701 = vpack.c.bf16 %v682, %v681
        %v702 = vpack.c.bf16 %v684, %v683
        %v703 = vpack.c.bf16 %v686, %v685
        %v704 = vpack.c.bf16 %v688, %v687
        %v705 = vperm.slane %v322, 0
        %v722 = vunpack.c.l.b16 %v343
        %v723 = vunpack.c.l.b16 %v344
        %v724 = vunpack.c.l.b16 %v345
        %v725 = vunpack.c.l.b16 %v346
        %v726 = vunpack.c.l.b16 %v347
        %v727 = vunpack.c.l.b16 %v348
        %v728 = vunpack.c.l.b16 %v349
        %v729 = vunpack.c.l.b16 %v350
        %v730 = vunpack.c.l.b16 %v351
        %v731 = vunpack.c.l.b16 %v352
        %v732 = vunpack.c.l.b16 %v353
        %v733 = vunpack.c.l.b16 %v354
        %v734 = vunpack.c.l.b16 %v355
        %v735 = vunpack.c.l.b16 %v356
        %v736 = vunpack.c.l.b16 %v357
        %v737 = vunpack.c.l.b16 %v358
        %v738 = vpack.c.b16 %v723, %v722
        %v739 = vpack.c.b16 %v725, %v724
        %v740 = vpack.c.b16 %v727, %v726
        %v741 = vpack.c.b16 %v729, %v728
        %v742 = vpack.c.b16 %v731, %v730
        %v743 = vpack.c.b16 %v733, %v732
        %v744 = vpack.c.b16 %v735, %v734
        %v745 = vpack.c.b16 %v737, %v736
        %754 = vmatpush.bf16.msra.mxu0 %v745
        %755 = vmatpush.bf16.msra.mxu0 %v744
        %756 = vmatpush.bf16.msra.mxu0 %v743
        %757 = vmatpush.bf16.msra.mxu0 %v742
        %758 = vmatpush.bf16.msra.mxu0 %v741
        %759 = vmatpush.bf16.msra.mxu0 %v740
        %760 = vmatpush.bf16.msra.mxu0 %v739
        %761 = vmatpush.bf16.msra.mxu0 %v738
        %762 = vmatmul.bf16.gmra.mxu0 %v689
        %v763 = vpop.f32.mrf.mxu0
        %v764 = vadd.f32 %v705, %v763
        %v765 = vpop.f32.mrf.mxu0
        %v766 = vadd.f32 %v705, %v765
        %767 = vmatmul.bf16.gmra.mxu0 %v690
        %v768 = vpop.f32.mrf.mxu0
        %v769 = vadd.f32 %v705, %v768
        %v770 = vpop.f32.mrf.mxu0
        %v771 = vadd.f32 %v705, %v770
        %772 = vmatmul.bf16.gmra.mxu0 %v691
        %v773 = vpop.f32.mrf.mxu0
        %v774 = vadd.f32 %v705, %v773
        %v775 = vpop.f32.mrf.mxu0
        %v776 = vadd.f32 %v705, %v775
        %777 = vmatmul.bf16.gmra.mxu0 %v692
        %v778 = vpop.f32.mrf.mxu0
        %v779 = vadd.f32 %v705, %v778
        %v780 = vpop.f32.mrf.mxu0
        %v781 = vadd.f32 %v705, %v780
        %782 = vmatmul.bf16.gmra.mxu0 %v693
        %v783 = vpop.f32.mrf.mxu0
        %v784 = vadd.f32 %v705, %v783
        %v785 = vpop.f32.mrf.mxu0
        %v786 = vadd.f32 %v705, %v785
        %787 = vmatmul.bf16.gmra.mxu0 %v694
        %v788 = vpop.f32.mrf.mxu0
        %v789 = vadd.f32 %v705, %v788
        %v790 = vpop.f32.mrf.mxu0
        %v791 = vadd.f32 %v705, %v790
        %792 = vmatmul.bf16.gmra.mxu0 %v695
        %v793 = vpop.f32.mrf.mxu0
        %v794 = vadd.f32 %v705, %v793
        %v795 = vpop.f32.mrf.mxu0
        %v796 = vadd.f32 %v705, %v795
        %797 = vmatmul.bf16.gmra.mxu0 %v696
        %v798 = vpop.f32.mrf.mxu0
        %v799 = vadd.f32 %v705, %v798
        %v800 = vpop.f32.mrf.mxu0
        %v801 = vadd.f32 %v705, %v800
        %802 = vmatmul.bf16.gmra.mxu0 %v697
        %v803 = vpop.f32.mrf.mxu0
        %v804 = vadd.f32 %v705, %v803
        %v805 = vpop.f32.mrf.mxu0
        %v806 = vadd.f32 %v705, %v805
        %807 = vmatmul.bf16.gmra.mxu0 %v698
        %v808 = vpop.f32.mrf.mxu0
        %v809 = vadd.f32 %v705, %v808
        %v810 = vpop.f32.mrf.mxu0
        %v811 = vadd.f32 %v705, %v810
        %812 = vmatmul.bf16.gmra.mxu0 %v699
        %v813 = vpop.f32.mrf.mxu0
        %v814 = vadd.f32 %v705, %v813
        %v815 = vpop.f32.mrf.mxu0
        %v816 = vadd.f32 %v705, %v815
        %817 = vmatmul.bf16.gmra.mxu0 %v700
        %v818 = vpop.f32.mrf.mxu0
        %v819 = vadd.f32 %v705, %v818
        %v820 = vpop.f32.mrf.mxu0
        %v821 = vadd.f32 %v705, %v820
        %822 = vmatmul.bf16.gmra.mxu0 %v701
        %v823 = vpop.f32.mrf.mxu0
        %v824 = vadd.f32 %v705, %v823
        %v825 = vpop.f32.mrf.mxu0
        %v826 = vadd.f32 %v705, %v825
        %827 = vmatmul.bf16.gmra.mxu0 %v702
        %v828 = vpop.f32.mrf.mxu0
        %v829 = vadd.f32 %v705, %v828
        %v830 = vpop.f32.mrf.mxu0
        %v831 = vadd.f32 %v705, %v830
        %832 = vmatmul.bf16.gmra.mxu0 %v703
        %v833 = vpop.f32.mrf.mxu0
        %v834 = vadd.f32 %v705, %v833
        %v835 = vpop.f32.mrf.mxu0
        %v836 = vadd.f32 %v705, %v835
        %837 = vmatmul.bf16.gmra.mxu0 %v704
        %v838 = vpop.f32.mrf.mxu0
        %v839 = vadd.f32 %v705, %v838
        %v840 = vpop.f32.mrf.mxu0
        %v841 = vadd.f32 %v705, %v840
        %842 = vdwg.mxu0
        %v843 = vperm.slane %v323, 0
        %v860 = vunpack.c.l.b16 %v359
        %v861 = vunpack.c.l.b16 %v360
        %v862 = vunpack.c.l.b16 %v361
        %v863 = vunpack.c.l.b16 %v362
        %v864 = vunpack.c.l.b16 %v363
        %v865 = vunpack.c.l.b16 %v364
        %v866 = vunpack.c.l.b16 %v365
        %v867 = vunpack.c.l.b16 %v366
        %v868 = vunpack.c.l.b16 %v367
        %v869 = vunpack.c.l.b16 %v368
        %v870 = vunpack.c.l.b16 %v369
        %v871 = vunpack.c.l.b16 %v370
        %v872 = vunpack.c.l.b16 %v371
        %v873 = vunpack.c.l.b16 %v372
        %v874 = vunpack.c.l.b16 %v373
        %v875 = vunpack.c.l.b16 %v374
        %v876 = vpack.c.b16 %v861, %v860
        %v877 = vpack.c.b16 %v863, %v862
        %v878 = vpack.c.b16 %v865, %v864
        %v879 = vpack.c.b16 %v867, %v866
        %v880 = vpack.c.b16 %v869, %v868
        %v881 = vpack.c.b16 %v871, %v870
        %v882 = vpack.c.b16 %v873, %v872
        %v883 = vpack.c.b16 %v875, %v874
        %892 = vmatpush.bf16.msra.mxu0 %v883
        %893 = vmatpush.bf16.msra.mxu0 %v882
        %894 = vmatpush.bf16.msra.mxu0 %v881
        %895 = vmatpush.bf16.msra.mxu0 %v880
        %896 = vmatpush.bf16.msra.mxu0 %v879
        %897 = vmatpush.bf16.msra.mxu0 %v878
        %898 = vmatpush.bf16.msra.mxu0 %v877
        %899 = vmatpush.bf16.msra.mxu0 %v876
        %900 = vmatmul.bf16.gmra.mxu0 %v689
        %v901 = vpop.f32.mrf.mxu0
        %v902 = vadd.f32 %v843, %v901
        %v903 = vpop.f32.mrf.mxu0
        %v904 = vadd.f32 %v843, %v903
        %905 = vmatmul.bf16.gmra.mxu0 %v690
        %v906 = vpop.f32.mrf.mxu0
        %v907 = vadd.f32 %v843, %v906
        %v908 = vpop.f32.mrf.mxu0
        %v909 = vadd.f32 %v843, %v908
        %910 = vmatmul.bf16.gmra.mxu0 %v691
        %v911 = vpop.f32.mrf.mxu0
        %v912 = vadd.f32 %v843, %v911
        %v913 = vpop.f32.mrf.mxu0
        %v914 = vadd.f32 %v843, %v913
        %915 = vmatmul.bf16.gmra.mxu0 %v692
        %v916 = vpop.f32.mrf.mxu0
        %v917 = vadd.f32 %v843, %v916
        %v918 = vpop.f32.mrf.mxu0
        %v919 = vadd.f32 %v843, %v918
        %920 = vmatmul.bf16.gmra.mxu0 %v693
        %v921 = vpop.f32.mrf.mxu0
        %v922 = vadd.f32 %v843, %v921
        %v923 = vpop.f32.mrf.mxu0
        %v924 = vadd.f32 %v843, %v923
        %925 = vmatmul.bf16.gmra.mxu0 %v694
        %v926 = vpop.f32.mrf.mxu0
        %v927 = vadd.f32 %v843, %v926
        %v928 = vpop.f32.mrf.mxu0
        %v929 = vadd.f32 %v843, %v928
        %930 = vmatmul.bf16.gmra.mxu0 %v695
        %v931 = vpop.f32.mrf.mxu0
        %v932 = vadd.f32 %v843, %v931
        %v933 = vpop.f32.mrf.mxu0
        %v934 = vadd.f32 %v843, %v933
        %935 = vmatmul.bf16.gmra.mxu0 %v696
        %v936 = vpop.f32.mrf.mxu0
        %v937 = vadd.f32 %v843, %v936
        %v938 = vpop.f32.mrf.mxu0
        %v939 = vadd.f32 %v843, %v938
        %940 = vmatmul.bf16.gmra.mxu0 %v697
        %v941 = vpop.f32.mrf.mxu0
        %v942 = vadd.f32 %v843, %v941
        %v943 = vpop.f32.mrf.mxu0
        %v944 = vadd.f32 %v843, %v943
        %945 = vmatmul.bf16.gmra.mxu0 %v698
        %v946 = vpop.f32.mrf.mxu0
        %v947 = vadd.f32 %v843, %v946
        %v948 = vpop.f32.mrf.mxu0
        %v949 = vadd.f32 %v843, %v948
        %950 = vmatmul.bf16.gmra.mxu0 %v699
        %v951 = vpop.f32.mrf.mxu0
        %v952 = vadd.f32 %v843, %v951
        %v953 = vpop.f32.mrf.mxu0
        %v954 = vadd.f32 %v843, %v953
        %955 = vmatmul.bf16.gmra.mxu0 %v700
        %v956 = vpop.f32.mrf.mxu0
        %v957 = vadd.f32 %v843, %v956
        %v958 = vpop.f32.mrf.mxu0
        %v959 = vadd.f32 %v843, %v958
        %960 = vmatmul.bf16.gmra.mxu0 %v701
        %v961 = vpop.f32.mrf.mxu0
        %v962 = vadd.f32 %v843, %v961
        %v963 = vpop.f32.mrf.mxu0
        %v964 = vadd.f32 %v843, %v963
        %965 = vmatmul.bf16.gmra.mxu0 %v702
        %v966 = vpop.f32.mrf.mxu0
        %v967 = vadd.f32 %v843, %v966
        %v968 = vpop.f32.mrf.mxu0
        %v969 = vadd.f32 %v843, %v968
        %970 = vmatmul.bf16.gmra.mxu0 %v703
        %v971 = vpop.f32.mrf.mxu0
        %v972 = vadd.f32 %v843, %v971
        %v973 = vpop.f32.mrf.mxu0
        %v974 = vadd.f32 %v843, %v973
        %975 = vmatmul.bf16.gmra.mxu0 %v704
        %v976 = vpop.f32.mrf.mxu0
        %v977 = vadd.f32 %v843, %v976
        %v978 = vpop.f32.mrf.mxu0
        %v979 = vadd.f32 %v843, %v978
        %980 = vdwg.mxu0
        %v981 = vmul.f32 %v902, 0.5
        %v982 = vmul.f32 %v904, 0.5
        %v983 = vmul.f32 %v907, 0.5
        %v984 = vmul.f32 %v909, 0.5
        %v985 = vmul.f32 %v912, 0.5
        %v986 = vmul.f32 %v914, 0.5
        %v987 = vmul.f32 %v917, 0.5
        %v988 = vmul.f32 %v919, 0.5
        %v989 = vmul.f32 %v922, 0.5
        %v990 = vmul.f32 %v924, 0.5
        %v991 = vmul.f32 %v927, 0.5
        %v992 = vmul.f32 %v929, 0.5
        %v993 = vmul.f32 %v932, 0.5
        %v994 = vmul.f32 %v934, 0.5
        %v995 = vmul.f32 %v937, 0.5
        %v996 = vmul.f32 %v939, 0.5
        %v997 = vmul.f32 %v942, 0.5
        %v998 = vmul.f32 %v944, 0.5
        %v999 = vmul.f32 %v947, 0.5
        %v1000 = vmul.f32 %v949, 0.5
        %v1001 = vmul.f32 %v952, 0.5
        %v1002 = vmul.f32 %v954, 0.5
        %v1003 = vmul.f32 %v957, 0.5
        %v1004 = vmul.f32 %v959, 0.5
        %v1005 = vmul.f32 %v962, 0.5
        %v1006 = vmul.f32 %v964, 0.5
        %v1007 = vmul.f32 %v967, 0.5
        %v1008 = vmul.f32 %v969, 0.5
        %v1009 = vmul.f32 %v972, 0.5
        %v1010 = vmul.f32 %v974, 0.5
        %v1011 = vmul.f32 %v977, 0.5
        %v1012 = vmul.f32 %v979, 0.5
        %v1013 = vmul.f32 %v981, 1.442695
        %v1014 = vpow.pop %v1013
        %v1015 = vmul.f32 %v982, 1.442695
        %v1016 = vpow.pop %v1015
        %v1017 = vmul.f32 %v983, 1.442695
        %v1018 = vpow.pop %v1017
        %v1019 = vmul.f32 %v984, 1.442695
        %v1020 = vpow.pop %v1019
        %v1021 = vmul.f32 %v985, 1.442695
        %v1022 = vpow.pop %v1021
        %v1023 = vmul.f32 %v986, 1.442695
        %v1024 = vpow.pop %v1023
        %v1025 = vmul.f32 %v987, 1.442695
        %v1026 = vpow.pop %v1025
        %v1027 = vmul.f32 %v988, 1.442695
        %v1028 = vpow.pop %v1027
        %v1029 = vmul.f32 %v989, 1.442695
        %v1030 = vpow.pop %v1029
        %v1031 = vmul.f32 %v990, 1.442695
        %v1032 = vpow.pop %v1031
        %v1033 = vmul.f32 %v991, 1.442695
        %v1034 = vpow.pop %v1033
        %v1035 = vmul.f32 %v992, 1.442695
        %v1036 = vpow.pop %v1035
        %v1037 = vmul.f32 %v993, 1.442695
        %v1038 = vpow.pop %v1037
        %v1039 = vmul.f32 %v994, 1.442695
        %v1040 = vpow.pop %v1039
        %v1041 = vmul.f32 %v995, 1.442695
        %v1042 = vpow.pop %v1041
        %v1043 = vmul.f32 %v996, 1.442695
        %v1044 = vpow.pop %v1043
        %v1045 = vmul.f32 %v997, 1.442695
        %v1046 = vpow.pop %v1045
        %v1047 = vmul.f32 %v998, 1.442695
        %v1048 = vpow.pop %v1047
        %v1049 = vmul.f32 %v999, 1.442695
        %v1050 = vpow.pop %v1049
        %v1051 = vmul.f32 %v1000, 1.442695
        %v1052 = vpow.pop %v1051
        %v1053 = vmul.f32 %v1001, 1.442695
        %v1054 = vpow.pop %v1053
        %v1055 = vmul.f32 %v1002, 1.442695
        %v1056 = vpow.pop %v1055
        %v1057 = vmul.f32 %v1003, 1.442695
        %v1058 = vpow.pop %v1057
        %v1059 = vmul.f32 %v1004, 1.442695
        %v1060 = vpow.pop %v1059
        %v1061 = vmul.f32 %v1005, 1.442695
        %v1062 = vpow.pop %v1061
        %v1063 = vmul.f32 %v1006, 1.442695
        %v1064 = vpow.pop %v1063
        %v1065 = vmul.f32 %v1007, 1.442695
        %v1066 = vpow.pop %v1065
        %v1067 = vmul.f32 %v1008, 1.442695
        %v1068 = vpow.pop %v1067
        %v1069 = vmul.f32 %v1009, 1.442695
        %v1070 = vpow.pop %v1069
        %v1071 = vmul.f32 %v1010, 1.442695
        %v1072 = vpow.pop %v1071
        %v1073 = vmul.f32 %v1011, 1.442695
        %v1074 = vpow.pop %v1073
        %v1075 = vmul.f32 %v1012, 1.442695
        %v1076 = vpow.pop %v1075
        %v1077 = vmul.f32 %v289, %v1014
        %v1078 = vmul.f32 %v290, %v1016
        %v1079 = vmul.f32 %v291, %v1018
        %v1080 = vmul.f32 %v292, %v1020
        %v1081 = vmul.f32 %v293, %v1022
        %v1082 = vmul.f32 %v294, %v1024
        %v1083 = vmul.f32 %v295, %v1026
        %v1084 = vmul.f32 %v296, %v1028
        %v1085 = vmul.f32 %v297, %v1030
        %v1086 = vmul.f32 %v298, %v1032
        %v1087 = vmul.f32 %v299, %v1034
        %v1088 = vmul.f32 %v300, %v1036
        %v1089 = vmul.f32 %v301, %v1038
        %v1090 = vmul.f32 %v302, %v1040
        %v1091 = vmul.f32 %v303, %v1042
        %v1092 = vmul.f32 %v304, %v1044
        %v1093 = vmul.f32 %v305, %v1046
        %v1094 = vmul.f32 %v306, %v1048
        %v1095 = vmul.f32 %v307, %v1050
        %v1096 = vmul.f32 %v308, %v1052
        %v1097 = vmul.f32 %v309, %v1054
        %v1098 = vmul.f32 %v310, %v1056
        %v1099 = vmul.f32 %v311, %v1058
        %v1100 = vmul.f32 %v312, %v1060
        %v1101 = vmul.f32 %v313, %v1062
        %v1102 = vmul.f32 %v314, %v1064
        %v1103 = vmul.f32 %v315, %v1066
        %v1104 = vmul.f32 %v316, %v1068
        %v1105 = vmul.f32 %v317, %v1070
        %v1106 = vmul.f32 %v318, %v1072
        %v1107 = vmul.f32 %v319, %v1074
        %v1108 = vmul.f32 %v320, %v1076
        %v1109 = vadd.f32 %v764, %v1077
        %v1110 = vadd.f32 %v766, %v1078
        %v1111 = vadd.f32 %v769, %v1079
        %v1112 = vadd.f32 %v771, %v1080
        %v1113 = vadd.f32 %v774, %v1081
        %v1114 = vadd.f32 %v776, %v1082
        %v1115 = vadd.f32 %v779, %v1083
        %v1116 = vadd.f32 %v781, %v1084
        %v1117 = vadd.f32 %v784, %v1085
        %v1118 = vadd.f32 %v786, %v1086
        %v1119 = vadd.f32 %v789, %v1087
        %v1120 = vadd.f32 %v791, %v1088
        %v1121 = vadd.f32 %v794, %v1089
        %v1122 = vadd.f32 %v796, %v1090
        %v1123 = vadd.f32 %v799, %v1091
        %v1124 = vadd.f32 %v801, %v1092
        %v1125 = vadd.f32 %v804, %v1093
        %v1126 = vadd.f32 %v806, %v1094
        %v1127 = vadd.f32 %v809, %v1095
        %v1128 = vadd.f32 %v811, %v1096
        %v1129 = vadd.f32 %v814, %v1097
        %v1130 = vadd.f32 %v816, %v1098
        %v1131 = vadd.f32 %v819, %v1099
        %v1132 = vadd.f32 %v821, %v1100
        %v1133 = vadd.f32 %v824, %v1101
        %v1134 = vadd.f32 %v826, %v1102
        %v1135 = vadd.f32 %v829, %v1103
        %v1136 = vadd.f32 %v831, %v1104
        %v1137 = vadd.f32 %v834, %v1105
        %v1138 = vadd.f32 %v836, %v1106
        %v1139 = vadd.f32 %v839, %v1107
        %v1140 = vadd.f32 %v841, %v1108
        %v1141 = vpack.c.bf16 %v1110, %v1109
        %v1142 = vpack.c.bf16 %v1112, %v1111
        %v1143 = vpack.c.bf16 %v1114, %v1113
        %v1144 = vpack.c.bf16 %v1116, %v1115
        %v1145 = vpack.c.bf16 %v1118, %v1117
        %v1146 = vpack.c.bf16 %v1120, %v1119
        %v1147 = vpack.c.bf16 %v1122, %v1121
        %v1148 = vpack.c.bf16 %v1124, %v1123
        %v1149 = vpack.c.bf16 %v1126, %v1125
        %v1150 = vpack.c.bf16 %v1128, %v1127
        %v1151 = vpack.c.bf16 %v1130, %v1129
        %v1152 = vpack.c.bf16 %v1132, %v1131
        %v1153 = vpack.c.bf16 %v1134, %v1133
        %v1154 = vpack.c.bf16 %v1136, %v1135
        %v1155 = vpack.c.bf16 %v1138, %v1137
        %v1156 = vpack.c.bf16 %v1140, %v1139
        %v1157 = vperm.slane %v324, 0
        %v1174 = vunpack.c.l.b16 %v375
        %v1175 = vunpack.c.l.b16 %v376
        %v1176 = vunpack.c.l.b16 %v377
        %v1177 = vunpack.c.l.b16 %v378
        %v1178 = vunpack.c.l.b16 %v379
        %v1179 = vunpack.c.l.b16 %v380
        %v1180 = vunpack.c.l.b16 %v381
        %v1181 = vunpack.c.l.b16 %v382
        %v1182 = vunpack.c.l.b16 %v383
        %v1183 = vunpack.c.l.b16 %v384
        %v1184 = vunpack.c.l.b16 %v385
        %v1185 = vunpack.c.l.b16 %v386
        %v1186 = vunpack.c.l.b16 %v387
        %v1187 = vunpack.c.l.b16 %v388
        %v1188 = vunpack.c.l.b16 %v389
        %v1189 = vunpack.c.l.b16 %v390
        %v1190 = vpack.c.b16 %v1175, %v1174
        %v1191 = vpack.c.b16 %v1177, %v1176
        %v1192 = vpack.c.b16 %v1179, %v1178
        %v1193 = vpack.c.b16 %v1181, %v1180
        %v1194 = vpack.c.b16 %v1183, %v1182
        %v1195 = vpack.c.b16 %v1185, %v1184
        %v1196 = vpack.c.b16 %v1187, %v1186
        %v1197 = vpack.c.b16 %v1189, %v1188
        %1206 = vmatpush.bf16.msra.mxu0 %v1197
        %1207 = vmatpush.bf16.msra.mxu0 %v1196
        %1208 = vmatpush.bf16.msra.mxu0 %v1195
        %1209 = vmatpush.bf16.msra.mxu0 %v1194
        %1210 = vmatpush.bf16.msra.mxu0 %v1193
        %1211 = vmatpush.bf16.msra.mxu0 %v1192
        %1212 = vmatpush.bf16.msra.mxu0 %v1191
        %1213 = vmatpush.bf16.msra.mxu0 %v1190
        %1214 = vmatmul.bf16.gmra.mxu0 %v1141
        %v1215 = vpop.f32.mrf.mxu0
        %v1216 = vadd.f32 %v1157, %v1215
        %v1217 = vpop.f32.mrf.mxu0
        %v1218 = vadd.f32 %v1157, %v1217
        %1219 = vmatmul.bf16.gmra.mxu0 %v1142
        %v1220 = vpop.f32.mrf.mxu0
        %v1221 = vadd.f32 %v1157, %v1220
        %v1222 = vpop.f32.mrf.mxu0
        %v1223 = vadd.f32 %v1157, %v1222
        %1224 = vmatmul.bf16.gmra.mxu0 %v1143
        %v1225 = vpop.f32.mrf.mxu0
        %v1226 = vadd.f32 %v1157, %v1225
        %v1227 = vpop.f32.mrf.mxu0
        %v1228 = vadd.f32 %v1157, %v1227
        %1229 = vmatmul.bf16.gmra.mxu0 %v1144
        %v1230 = vpop.f32.mrf.mxu0
        %v1231 = vadd.f32 %v1157, %v1230
        %v1232 = vpop.f32.mrf.mxu0
        %v1233 = vadd.f32 %v1157, %v1232
        %1234 = vmatmul.bf16.gmra.mxu0 %v1145
        %v1235 = vpop.f32.mrf.mxu0
        %v1236 = vadd.f32 %v1157, %v1235
        %v1237 = vpop.f32.mrf.mxu0
        %v1238 = vadd.f32 %v1157, %v1237
        %1239 = vmatmul.bf16.gmra.mxu0 %v1146
        %v1240 = vpop.f32.mrf.mxu0
        %v1241 = vadd.f32 %v1157, %v1240
        %v1242 = vpop.f32.mrf.mxu0
        %v1243 = vadd.f32 %v1157, %v1242
        %1244 = vmatmul.bf16.gmra.mxu0 %v1147
        %v1245 = vpop.f32.mrf.mxu0
        %v1246 = vadd.f32 %v1157, %v1245
        %v1247 = vpop.f32.mrf.mxu0
        %v1248 = vadd.f32 %v1157, %v1247
        %1249 = vmatmul.bf16.gmra.mxu0 %v1148
        %v1250 = vpop.f32.mrf.mxu0
        %v1251 = vadd.f32 %v1157, %v1250
        %v1252 = vpop.f32.mrf.mxu0
        %v1253 = vadd.f32 %v1157, %v1252
        %1254 = vmatmul.bf16.gmra.mxu0 %v1149
        %v1255 = vpop.f32.mrf.mxu0
        %v1256 = vadd.f32 %v1157, %v1255
        %v1257 = vpop.f32.mrf.mxu0
        %v1258 = vadd.f32 %v1157, %v1257
        %1259 = vmatmul.bf16.gmra.mxu0 %v1150
        %v1260 = vpop.f32.mrf.mxu0
        %v1261 = vadd.f32 %v1157, %v1260
        %v1262 = vpop.f32.mrf.mxu0
        %v1263 = vadd.f32 %v1157, %v1262
        %1264 = vmatmul.bf16.gmra.mxu0 %v1151
        %v1265 = vpop.f32.mrf.mxu0
        %v1266 = vadd.f32 %v1157, %v1265
        %v1267 = vpop.f32.mrf.mxu0
        %v1268 = vadd.f32 %v1157, %v1267
        %1269 = vmatmul.bf16.gmra.mxu0 %v1152
        %v1270 = vpop.f32.mrf.mxu0
        %v1271 = vadd.f32 %v1157, %v1270
        %v1272 = vpop.f32.mrf.mxu0
        %v1273 = vadd.f32 %v1157, %v1272
        %1274 = vmatmul.bf16.gmra.mxu0 %v1153
        %v1275 = vpop.f32.mrf.mxu0
        %v1276 = vadd.f32 %v1157, %v1275
        %v1277 = vpop.f32.mrf.mxu0
        %v1278 = vadd.f32 %v1157, %v1277
        %1279 = vmatmul.bf16.gmra.mxu0 %v1154
        %v1280 = vpop.f32.mrf.mxu0
        %v1281 = vadd.f32 %v1157, %v1280
        %v1282 = vpop.f32.mrf.mxu0
        %v1283 = vadd.f32 %v1157, %v1282
        %1284 = vmatmul.bf16.gmra.mxu0 %v1155
        %v1285 = vpop.f32.mrf.mxu0
        %v1286 = vadd.f32 %v1157, %v1285
        %v1287 = vpop.f32.mrf.mxu0
        %v1288 = vadd.f32 %v1157, %v1287
        %1289 = vmatmul.bf16.gmra.mxu0 %v1156
        %v1290 = vpop.f32.mrf.mxu0
        %v1291 = vadd.f32 %v1157, %v1290
        %v1292 = vpop.f32.mrf.mxu0
        %v1293 = vadd.f32 %v1157, %v1292
        %1294 = vdwg.mxu0
        %v1295 = vperm.slane %v325, 0
        %v1312 = vunpack.c.l.b16 %v391
        %v1313 = vunpack.c.l.b16 %v392
        %v1314 = vunpack.c.l.b16 %v393
        %v1315 = vunpack.c.l.b16 %v394
        %v1316 = vunpack.c.l.b16 %v395
        %v1317 = vunpack.c.l.b16 %v396
        %v1318 = vunpack.c.l.b16 %v397
        %v1319 = vunpack.c.l.b16 %v398
        %v1320 = vunpack.c.l.b16 %v399
        %v1321 = vunpack.c.l.b16 %v400
        %v1322 = vunpack.c.l.b16 %v401
        %v1323 = vunpack.c.l.b16 %v402
        %v1324 = vunpack.c.l.b16 %v403
        %v1325 = vunpack.c.l.b16 %v404
        %v1326 = vunpack.c.l.b16 %v405
        %v1327 = vunpack.c.l.b16 %v406
        %v1328 = vpack.c.b16 %v1313, %v1312
        %v1329 = vpack.c.b16 %v1315, %v1314
        %v1330 = vpack.c.b16 %v1317, %v1316
        %v1331 = vpack.c.b16 %v1319, %v1318
        %v1332 = vpack.c.b16 %v1321, %v1320
        %v1333 = vpack.c.b16 %v1323, %v1322
        %v1334 = vpack.c.b16 %v1325, %v1324
        %v1335 = vpack.c.b16 %v1327, %v1326
        %1344 = vmatpush.bf16.msra.mxu0 %v1335
        %1345 = vmatpush.bf16.msra.mxu0 %v1334
        %1346 = vmatpush.bf16.msra.mxu0 %v1333
        %1347 = vmatpush.bf16.msra.mxu0 %v1332
        %1348 = vmatpush.bf16.msra.mxu0 %v1331
        %1349 = vmatpush.bf16.msra.mxu0 %v1330
        %1350 = vmatpush.bf16.msra.mxu0 %v1329
        %1351 = vmatpush.bf16.msra.mxu0 %v1328
        %1352 = vmatmul.bf16.gmra.mxu0 %v1141
        %v1353 = vpop.f32.mrf.mxu0
        %v1354 = vadd.f32 %v1295, %v1353
        %v1355 = vpop.f32.mrf.mxu0
        %v1356 = vadd.f32 %v1295, %v1355
        %1357 = vmatmul.bf16.gmra.mxu0 %v1142
        %v1358 = vpop.f32.mrf.mxu0
        %v1359 = vadd.f32 %v1295, %v1358
        %v1360 = vpop.f32.mrf.mxu0
        %v1361 = vadd.f32 %v1295, %v1360
        %1362 = vmatmul.bf16.gmra.mxu0 %v1143
        %v1363 = vpop.f32.mrf.mxu0
        %v1364 = vadd.f32 %v1295, %v1363
        %v1365 = vpop.f32.mrf.mxu0
        %v1366 = vadd.f32 %v1295, %v1365
        %1367 = vmatmul.bf16.gmra.mxu0 %v1144
        %v1368 = vpop.f32.mrf.mxu0
        %v1369 = vadd.f32 %v1295, %v1368
        %v1370 = vpop.f32.mrf.mxu0
        %v1371 = vadd.f32 %v1295, %v1370
        %1372 = vmatmul.bf16.gmra.mxu0 %v1145
        %v1373 = vpop.f32.mrf.mxu0
        %v1374 = vadd.f32 %v1295, %v1373
        %v1375 = vpop.f32.mrf.mxu0
        %v1376 = vadd.f32 %v1295, %v1375
        %1377 = vmatmul.bf16.gmra.mxu0 %v1146
        %v1378 = vpop.f32.mrf.mxu0
        %v1379 = vadd.f32 %v1295, %v1378
        %v1380 = vpop.f32.mrf.mxu0
        %v1381 = vadd.f32 %v1295, %v1380
        %1382 = vmatmul.bf16.gmra.mxu0 %v1147
        %v1383 = vpop.f32.mrf.mxu0
        %v1384 = vadd.f32 %v1295, %v1383
        %v1385 = vpop.f32.mrf.mxu0
        %v1386 = vadd.f32 %v1295, %v1385
        %1387 = vmatmul.bf16.gmra.mxu0 %v1148
        %v1388 = vpop.f32.mrf.mxu0
        %v1389 = vadd.f32 %v1295, %v1388
        %v1390 = vpop.f32.mrf.mxu0
        %v1391 = vadd.f32 %v1295, %v1390
        %1392 = vmatmul.bf16.gmra.mxu0 %v1149
        %v1393 = vpop.f32.mrf.mxu0
        %v1394 = vadd.f32 %v1295, %v1393
        %v1395 = vpop.f32.mrf.mxu0
        %v1396 = vadd.f32 %v1295, %v1395
        %1397 = vmatmul.bf16.gmra.mxu0 %v1150
        %v1398 = vpop.f32.mrf.mxu0
        %v1399 = vadd.f32 %v1295, %v1398
        %v1400 = vpop.f32.mrf.mxu0
        %v1401 = vadd.f32 %v1295, %v1400
        %1402 = vmatmul.bf16.gmra.mxu0 %v1151
        %v1403 = vpop.f32.mrf.mxu0
        %v1404 = vadd.f32 %v1295, %v1403
        %v1405 = vpop.f32.mrf.mxu0
        %v1406 = vadd.f32 %v1295, %v1405
        %1407 = vmatmul.bf16.gmra.mxu0 %v1152
        %v1408 = vpop.f32.mrf.mxu0
        %v1409 = vadd.f32 %v1295, %v1408
        %v1410 = vpop.f32.mrf.mxu0
        %v1411 = vadd.f32 %v1295, %v1410
        %1412 = vmatmul.bf16.gmra.mxu0 %v1153
        %v1413 = vpop.f32.mrf.mxu0
        %v1414 = vadd.f32 %v1295, %v1413
        %v1415 = vpop.f32.mrf.mxu0
        %v1416 = vadd.f32 %v1295, %v1415
        %1417 = vmatmul.bf16.gmra.mxu0 %v1154
        %v1418 = vpop.f32.mrf.mxu0
        %v1419 = vadd.f32 %v1295, %v1418
        %v1420 = vpop.f32.mrf.mxu0
        %v1421 = vadd.f32 %v1295, %v1420
        %1422 = vmatmul.bf16.gmra.mxu0 %v1155
        %v1423 = vpop.f32.mrf.mxu0
        %v1424 = vadd.f32 %v1295, %v1423
        %v1425 = vpop.f32.mrf.mxu0
        %v1426 = vadd.f32 %v1295, %v1425
        %1427 = vmatmul.bf16.gmra.mxu0 %v1156
        %v1428 = vpop.f32.mrf.mxu0
        %v1429 = vadd.f32 %v1295, %v1428
        %v1430 = vpop.f32.mrf.mxu0
        %v1431 = vadd.f32 %v1295, %v1430
        %1432 = vdwg.mxu0
        %v1433 = vpack.c.bf16 %v1356, %v1354
        %v1434 = vpack.c.bf16 %v1361, %v1359
        %v1435 = vpack.c.bf16 %v1366, %v1364
        %v1436 = vpack.c.bf16 %v1371, %v1369
        %v1437 = vpack.c.bf16 %v1376, %v1374
        %v1438 = vpack.c.bf16 %v1381, %v1379
        %v1439 = vpack.c.bf16 %v1386, %v1384
        %v1440 = vpack.c.bf16 %v1391, %v1389
        %v1441 = vpack.c.bf16 %v1396, %v1394
        %v1442 = vpack.c.bf16 %v1401, %v1399
        %v1443 = vpack.c.bf16 %v1406, %v1404
        %v1444 = vpack.c.bf16 %v1411, %v1409
        %v1445 = vpack.c.bf16 %v1416, %v1414
        %v1446 = vpack.c.bf16 %v1421, %v1419
        %v1447 = vpack.c.bf16 %v1426, %v1424
        %v1448 = vpack.c.bf16 %v1431, %v1429
        %v1449 = vperm.slane %v326, 0
        %v1466 = vunpack.c.l.b16 %v407
        %v1467 = vunpack.c.l.b16 %v408
        %v1468 = vunpack.c.l.b16 %v409
        %v1469 = vunpack.c.l.b16 %v410
        %v1470 = vunpack.c.l.b16 %v411
        %v1471 = vunpack.c.l.b16 %v412
        %v1472 = vunpack.c.l.b16 %v413
        %v1473 = vunpack.c.l.b16 %v414
        %v1474 = vunpack.c.l.b16 %v415
        %v1475 = vunpack.c.l.b16 %v416
        %v1476 = vunpack.c.l.b16 %v417
        %v1477 = vunpack.c.l.b16 %v418
        %v1478 = vunpack.c.l.b16 %v419
        %v1479 = vunpack.c.l.b16 %v420
        %v1480 = vunpack.c.l.b16 %v421
        %v1481 = vunpack.c.l.b16 %v422
        %v1482 = vpack.c.b16 %v1467, %v1466
        %v1483 = vpack.c.b16 %v1469, %v1468
        %v1484 = vpack.c.b16 %v1471, %v1470
        %v1485 = vpack.c.b16 %v1473, %v1472
        %v1486 = vpack.c.b16 %v1475, %v1474
        %v1487 = vpack.c.b16 %v1477, %v1476
        %v1488 = vpack.c.b16 %v1479, %v1478
        %v1489 = vpack.c.b16 %v1481, %v1480
        %1498 = vmatpush.bf16.msra.mxu0 %v1489
        %1499 = vmatpush.bf16.msra.mxu0 %v1488
        %1500 = vmatpush.bf16.msra.mxu0 %v1487
        %1501 = vmatpush.bf16.msra.mxu0 %v1486
        %1502 = vmatpush.bf16.msra.mxu0 %v1485
        %1503 = vmatpush.bf16.msra.mxu0 %v1484
        %1504 = vmatpush.bf16.msra.mxu0 %v1483
        %1505 = vmatpush.bf16.msra.mxu0 %v1482
        %1506 = vmatmul.bf16.gmra.mxu0 %v1433
        %v1507 = vpop.f32.mrf.mxu0
        %v1508 = vadd.f32 %v1449, %v1507
        %v1509 = vpop.f32.mrf.mxu0
        %v1510 = vadd.f32 %v1449, %v1509
        %1511 = vmatmul.bf16.gmra.mxu0 %v1434
        %v1512 = vpop.f32.mrf.mxu0
        %v1513 = vadd.f32 %v1449, %v1512
        %v1514 = vpop.f32.mrf.mxu0
        %v1515 = vadd.f32 %v1449, %v1514
        %1516 = vmatmul.bf16.gmra.mxu0 %v1435
        %v1517 = vpop.f32.mrf.mxu0
        %v1518 = vadd.f32 %v1449, %v1517
        %v1519 = vpop.f32.mrf.mxu0
        %v1520 = vadd.f32 %v1449, %v1519
        %1521 = vmatmul.bf16.gmra.mxu0 %v1436
        %v1522 = vpop.f32.mrf.mxu0
        %v1523 = vadd.f32 %v1449, %v1522
        %v1524 = vpop.f32.mrf.mxu0
        %v1525 = vadd.f32 %v1449, %v1524
        %1526 = vmatmul.bf16.gmra.mxu0 %v1437
        %v1527 = vpop.f32.mrf.mxu0
        %v1528 = vadd.f32 %v1449, %v1527
        %v1529 = vpop.f32.mrf.mxu0
        %v1530 = vadd.f32 %v1449, %v1529
        %1531 = vmatmul.bf16.gmra.mxu0 %v1438
        %v1532 = vpop.f32.mrf.mxu0
        %v1533 = vadd.f32 %v1449, %v1532
        %v1534 = vpop.f32.mrf.mxu0
        %v1535 = vadd.f32 %v1449, %v1534
        %1536 = vmatmul.bf16.gmra.mxu0 %v1439
        %v1537 = vpop.f32.mrf.mxu0
        %v1538 = vadd.f32 %v1449, %v1537
        %v1539 = vpop.f32.mrf.mxu0
        %v1540 = vadd.f32 %v1449, %v1539
        %1541 = vmatmul.bf16.gmra.mxu0 %v1440
        %v1542 = vpop.f32.mrf.mxu0
        %v1543 = vadd.f32 %v1449, %v1542
        %v1544 = vpop.f32.mrf.mxu0
        %v1545 = vadd.f32 %v1449, %v1544
        %1546 = vmatmul.bf16.gmra.mxu0 %v1441
        %v1547 = vpop.f32.mrf.mxu0
        %v1548 = vadd.f32 %v1449, %v1547
        %v1549 = vpop.f32.mrf.mxu0
        %v1550 = vadd.f32 %v1449, %v1549
        %1551 = vmatmul.bf16.gmra.mxu0 %v1442
        %v1552 = vpop.f32.mrf.mxu0
        %v1553 = vadd.f32 %v1449, %v1552
        %v1554 = vpop.f32.mrf.mxu0
        %v1555 = vadd.f32 %v1449, %v1554
        %1556 = vmatmul.bf16.gmra.mxu0 %v1443
        %v1557 = vpop.f32.mrf.mxu0
        %v1558 = vadd.f32 %v1449, %v1557
        %v1559 = vpop.f32.mrf.mxu0
        %v1560 = vadd.f32 %v1449, %v1559
        %1561 = vmatmul.bf16.gmra.mxu0 %v1444
        %v1562 = vpop.f32.mrf.mxu0
        %v1563 = vadd.f32 %v1449, %v1562
        %v1564 = vpop.f32.mrf.mxu0
        %v1565 = vadd.f32 %v1449, %v1564
        %1566 = vmatmul.bf16.gmra.mxu0 %v1445
        %v1567 = vpop.f32.mrf.mxu0
        %v1568 = vadd.f32 %v1449, %v1567
        %v1569 = vpop.f32.mrf.mxu0
        %v1570 = vadd.f32 %v1449, %v1569
        %1571 = vmatmul.bf16.gmra.mxu0 %v1446
        %v1572 = vpop.f32.mrf.mxu0
        %v1573 = vadd.f32 %v1449, %v1572
        %v1574 = vpop.f32.mrf.mxu0
        %v1575 = vadd.f32 %v1449, %v1574
        %1576 = vmatmul.bf16.gmra.mxu0 %v1447
        %v1577 = vpop.f32.mrf.mxu0
        %v1578 = vadd.f32 %v1449, %v1577
        %v1579 = vpop.f32.mrf.mxu0
        %v1580 = vadd.f32 %v1449, %v1579
        %1581 = vmatmul.bf16.gmra.mxu0 %v1448
        %v1582 = vpop.f32.mrf.mxu0
        %v1583 = vadd.f32 %v1449, %v1582
        %v1584 = vpop.f32.mrf.mxu0
        %v1585 = vadd.f32 %v1449, %v1584
        %1586 = vdwg.mxu0
        %1587 = vst [vmem:[%s222] sm:$0xff] %v1508
        %1588 = vst [vmem:[%s222 + $0x10] sm:$0xff] %v1510
        %1589 = vst [vmem:[%s222 + $0x20] sm:$0xff] %v1513
        %1590 = vst [vmem:[%s222 + $0x30] sm:$0xff] %v1515
        %1591 = vst [vmem:[%s222 + $0x40] sm:$0xff] %v1518
        %1592 = vst [vmem:[%s222 + $0x50] sm:$0xff] %v1520
        %1593 = vst [vmem:[%s222 + $0x60] sm:$0xff] %v1523
        %1594 = vst [vmem:[%s222 + $0x70] sm:$0xff] %v1525
        %1595 = vst [vmem:[%s222 + $0x80] sm:$0xff] %v1528
        %1596 = vst [vmem:[%s222 + $0x90] sm:$0xff] %v1530
        %1597 = vst [vmem:[%s222 + $0xa0] sm:$0xff] %v1533
        %1598 = vst [vmem:[%s222 + $0xb0] sm:$0xff] %v1535
        %1599 = vst [vmem:[%s222 + $0xc0] sm:$0xff] %v1538
        %1600 = vst [vmem:[%s222 + $0xd0] sm:$0xff] %v1540
        %1601 = vst [vmem:[%s222 + $0xe0] sm:$0xff] %v1543
        %1602 = vst [vmem:[%s222 + $0xf0] sm:$0xff] %v1545
        %1603 = vst [vmem:[%s222 + $0x100] sm:$0xff] %v1548
        %1604 = vst [vmem:[%s222 + $0x110] sm:$0xff] %v1550
        %1605 = vst [vmem:[%s222 + $0x120] sm:$0xff] %v1553
        %1606 = vst [vmem:[%s222 + $0x130] sm:$0xff] %v1555
        %1607 = vst [vmem:[%s222 + $0x140] sm:$0xff] %v1558
        %1608 = vst [vmem:[%s222 + $0x150] sm:$0xff] %v1560
        %1609 = vst [vmem:[%s222 + $0x160] sm:$0xff] %v1563
        %1610 = vst [vmem:[%s222 + $0x170] sm:$0xff] %v1565
        %1611 = vst [vmem:[%s222 + $0x180] sm:$0xff] %v1568
        %1612 = vst [vmem:[%s222 + $0x190] sm:$0xff] %v1570
        %1613 = vst [vmem:[%s222 + $0x1a0] sm:$0xff] %v1573
        %1614 = vst [vmem:[%s222 + $0x1b0] sm:$0xff] %v1575
        %1615 = vst [vmem:[%s222 + $0x1c0] sm:$0xff] %v1578
        %1616 = vst [vmem:[%s222 + $0x1d0] sm:$0xff] %v1580
        %1617 = vst [vmem:[%s222 + $0x1e0] sm:$0xff] %v1583
        %1618 = vst [vmem:[%s222 + $0x1f0] sm:$0xff] %v1585
        %v1619 = vadd.f32 %v764, %v1216
        %v1620 = vadd.f32 %v766, %v1218
        %v1621 = vadd.f32 %v769, %v1221
        %v1622 = vadd.f32 %v771, %v1223
        %v1623 = vadd.f32 %v774, %v1226
        %v1624 = vadd.f32 %v776, %v1228
        %v1625 = vadd.f32 %v779, %v1231
        %v1626 = vadd.f32 %v781, %v1233
        %v1627 = vadd.f32 %v784, %v1236
        %v1628 = vadd.f32 %v786, %v1238
        %v1629 = vadd.f32 %v789, %v1241
        %v1630 = vadd.f32 %v791, %v1243
        %v1631 = vadd.f32 %v794, %v1246
        %v1632 = vadd.f32 %v796, %v1248
        %v1633 = vadd.f32 %v799, %v1251
        %v1634 = vadd.f32 %v801, %v1253
        %v1635 = vadd.f32 %v804, %v1256
        %v1636 = vadd.f32 %v806, %v1258
        %v1637 = vadd.f32 %v809, %v1261
        %v1638 = vadd.f32 %v811, %v1263
        %v1639 = vadd.f32 %v814, %v1266
        %v1640 = vadd.f32 %v816, %v1268
        %v1641 = vadd.f32 %v819, %v1271
        %v1642 = vadd.f32 %v821, %v1273
        %v1643 = vadd.f32 %v824, %v1276
        %v1644 = vadd.f32 %v826, %v1278
        %v1645 = vadd.f32 %v829, %v1281
        %v1646 = vadd.f32 %v831, %v1283
        %v1647 = vadd.f32 %v834, %v1286
        %v1648 = vadd.f32 %v836, %v1288
        %v1649 = vadd.f32 %v839, %v1291
        %v1650 = vadd.f32 %v841, %v1293
        %1651 = vst [vmem:[%s222 + $0x8] sm:$0xff] %v1619
        %1652 = vst [vmem:[%s222 + $0x18] sm:$0xff] %v1620
        %1653 = vst [vmem:[%s222 + $0x28] sm:$0xff] %v1621
        %1654 = vst [vmem:[%s222 + $0x38] sm:$0xff] %v1622
        %1655 = vst [vmem:[%s222 + $0x48] sm:$0xff] %v1623
        %1656 = vst [vmem:[%s222 + $0x58] sm:$0xff] %v1624
        %1657 = vst [vmem:[%s222 + $0x68] sm:$0xff] %v1625
        %1658 = vst [vmem:[%s222 + $0x78] sm:$0xff] %v1626
        %1659 = vst [vmem:[%s222 + $0x88] sm:$0xff] %v1627
        %1660 = vst [vmem:[%s222 + $0x98] sm:$0xff] %v1628
        %1661 = vst [vmem:[%s222 + $0xa8] sm:$0xff] %v1629
        %1662 = vst [vmem:[%s222 + $0xb8] sm:$0xff] %v1630
        %1663 = vst [vmem:[%s222 + $0xc8] sm:$0xff] %v1631
        %1664 = vst [vmem:[%s222 + $0xd8] sm:$0xff] %v1632
        %1665 = vst [vmem:[%s222 + $0xe8] sm:$0xff] %v1633
        %1666 = vst [vmem:[%s222 + $0xf8] sm:$0xff] %v1634
        %1667 = vst [vmem:[%s222 + $0x108] sm:$0xff] %v1635
        %1668 = vst [vmem:[%s222 + $0x118] sm:$0xff] %v1636
        %1669 = vst [vmem:[%s222 + $0x128] sm:$0xff] %v1637
        %1670 = vst [vmem:[%s222 + $0x138] sm:$0xff] %v1638
        %1671 = vst [vmem:[%s222 + $0x148] sm:$0xff] %v1639
        %1672 = vst [vmem:[%s222 + $0x158] sm:$0xff] %v1640
        %1673 = vst [vmem:[%s222 + $0x168] sm:$0xff] %v1641
        %1674 = vst [vmem:[%s222 + $0x178] sm:$0xff] %v1642
        %1675 = vst [vmem:[%s222 + $0x188] sm:$0xff] %v1643
        %1676 = vst [vmem:[%s222 + $0x198] sm:$0xff] %v1644
        %1677 = vst [vmem:[%s222 + $0x1a8] sm:$0xff] %v1645
        %1678 = vst [vmem:[%s222 + $0x1b8] sm:$0xff] %v1646
        %1679 = vst [vmem:[%s222 + $0x1c8] sm:$0xff] %v1647
        %1680 = vst [vmem:[%s222 + $0x1d8] sm:$0xff] %v1648
        %1681 = vst [vmem:[%s222 + $0x1e8] sm:$0xff] %v1649
        %1682 = vst [vmem:[%s222 + $0x1f8] sm:$0xff] %v1650
        %s1683 = sand.u32 %s97, 1
        %s1684 = scalar_lea.sflag [#allocation4], %s1683
        %s1685 = sand.u32 %s97, 1
        %s1686 = smul.addr %s1685, 512
        %s1687 = scalar_lea.vmem [#allocation8], %s1686
        // Predicated region
        $region45: #{tpu_custom_call.1} parent=31 // pred_check
          %p1688 = pneg %p107
        $region46: #{tpu_custom_call.1} parent=31 // pred_check_branch
          %1690 = sbr.rel (%p1688) target = $region48
        $region47: #{tpu_custom_call.1} parent=31 // pred_region
          %s1691 = smul.u32 32, %s21
          %1693 = vsyncadd %s1684, 0
          %s1694 = smul.addr %s1691, 2
          %s1695 = smul.addr %s1694, 8
          %s1696 = scalar_lea.hbm %s3, %s1695
          %s1697 = sshll.u32 %s1687, 4
          %s1698 = int_to_ptr.vmem [resolvable:$true] %s1697
          %s1699 = sshll.u32 %s1696, 4
          %s1700 = int_to_ptr.hbm [resolvable:$true] %s1699
          %1705 = dma.vmem_to_hbm [thread:$0]  %s1698, 8192, %s1700, %s1684, 256, 256, 16
        $region48: #{tpu_custom_call.1} parent=31 // pred_fallthru
          _
      $region32: #{tpu_custom_call.1} parent=5 // pred_fallthru
        _
      %p1706 = scmp.le.s32.totalorder 2, %s16
      // Predicated region
      $region49: #{tpu_custom_call.1} parent=5 // pred_check
        %p1707 = pneg %p1706
      $region50: #{tpu_custom_call.1} parent=5 // pred_check_branch
        %1709 = sbr.rel (%p1707) target = $region52
      $region51: #{tpu_custom_call.1} parent=5 // pred_region
        %s1710 = ssub.s32 %s16, 2
        // Predicated region
        $region53: #{tpu_custom_call.1} parent=51 // pred_check
          %p1711 = pneg %p113
        $region54: #{tpu_custom_call.1} parent=51 // pred_check_branch
          %1713 = sbr.rel (%p1711) target = $region56
        $region55: #{tpu_custom_call.1} parent=51 // pred_region
          %s1714 = sand.u32 %s98, 1
          %s1715 = scalar_lea.sflag [#allocation4], %s1714
          %s1716 = sand.u32 %s98, 1
          %s1717 = smul.addr %s1716, 512
          %s1718 = scalar_lea.vmem [#allocation8], %s1717
          %1720 = dma.done %s1715, 8192
        $region56: #{tpu_custom_call.1} parent=51 // pred_fallthru
          _
      $region52: #{tpu_custom_call.1} parent=5 // pred_fallthru
        _
    $region6: #{tpu_custom_call.1} parent=1 // loop_footer
      %s20 = sadd.s32 1, %s16
    $region7: #{tpu_custom_call.1} parent=1 // loop_footer_branch
      %15 = sbr.rel target = $region3
    $region8: #{tpu_custom_call.1} parent=1 // loop_exit
      _
    %1721 = vsyncpa [#allocation3], 1
    %s1722 = scalar_lea.sflag [#allocation3], 1
    %1723 = vsyncpa %s1722, 1
    %1724 = vsyncpa [#allocation6], 1
    %1725 = vsyncpa [#allocation4], 1
    %s1726 = scalar_lea.sflag [#allocation4], 1
    %1727 = vsyncpa %s1726, 1

</llo_original>
